<compile_context>
chip_gen: v7x
topology: tpu7x:2x2x1
jax: 0.10.0
libtpu: 0.0.40
codegen_flags: <defaults>
</compile_context>

<pallas_src>
import functools

import numpy as np
import jax
import jax.numpy as jnp
from jax.experimental import pallas as pl
from jax.experimental.pallas import tpu as pltpu


def _round_up(x, m):
    return (x + m - 1) // m * m


def _pad_last(x, to):
    pad = to - x.shape[-1]
    if pad == 0:
        return x
    widths = [(0, 0)] * (x.ndim - 1) + [(0, pad)]
    return jnp.pad(x, widths)


# ----------------------------------------------------------------------------
# Fused decoder kernel: one grid step = one batch element, all layers.
# ----------------------------------------------------------------------------
def fused_decoder_kernel(
    emb_ref,      # (1, T, E)  f32   word+pos embedding
    encv_ref,     # (1, S, E)  f32   enc_conved
    encc_ref,     # (1, S, E)  f32   enc_combined
    we2h_ref,     # (E, H)     bf16  emb2hid
    be2h_ref,     # (1, H)     f32
    convw_ref,    # (L, K*H, 2H) bf16  fused GLU conv weights (a || b), im2col
    convb_ref,    # (L, 1, 2H)   f32
    wah2e_ref,    # (H, E)     bf16  att_hid2emd (shared across layers)
    bah2e_ref,    # (1, E)     f32
    wae2h_ref,    # (E, H)     bf16  att_emb2hid (shared across layers)
    bae2h_ref,    # (1, H)     f32
    wh2e_ref,     # (H, E)     bf16  hid2emd
    bh2e_ref,     # (1, E)     f32
    wout_ref,     # (E, V_pad) bf16  out (zero-padded to lane-dense width)
    bout_ref,     # (1, V_pad) f32
    out_ref,      # (1, T, V_pad + S_pad) f32  [logits | attn scores] slab
    *, n_layers, kernel_size, hidden, seq_t, src_s, s_pad, scale, pad_id,
):
    bf16 = jnp.bfloat16
    T, K, H, L, S = seq_t, kernel_size, hidden, n_layers, src_s

    emb = emb_ref[0]                                   # (T, E) f32
    emb_bf = emb.astype(bf16)
    encc = encc_ref[0]                                 # (S, E) f32
    encc_bf = encc.astype(bf16)
    enckv_bf = (encv_ref[0] + encc).astype(bf16)       # (S, E) enc_conved + enc_combined

    # emb2hid
    conv_input = (
        jnp.dot(emb_bf, we2h_ref[...], preferred_element_type=jnp.float32)
        + be2h_ref[...]
    )                                                  # (T, H) f32

    pad_rows = jnp.full((K - 1, H), float(pad_id), jnp.float32)
    score = None
    for l in range(L):                                 # L is a small static constant
        # causal pad (fill = pad_id) + im2col -> one wide matmul for the GLU conv
        p = jnp.concatenate([pad_rows, conv_input], axis=0)                 # (T+K-1, H)
        xcat = jnp.concatenate([p[k:k + T] for k in range(K)], axis=1)      # (T, K*H)
        conved = (
            jnp.dot(xcat.astype(bf16), convw_ref[l],
                    preferred_element_type=jnp.float32)
            + convb_ref[l]
        )                                                                   # (T, 2H)
        glu = conved[:, :H] * jax.nn.sigmoid(conved[:, H:])                 # (T, H)

        # attention (weights shared across layers)
        dce = (
            jnp.dot(glu.astype(bf16), wah2e_ref[...],
                    preferred_element_type=jnp.float32)
            + bah2e_ref[...]
        )                                                                   # (T, E)
        dec_combined = (emb + dce) * scale                                  # (T, E)
        am = jax.lax.dot_general(
            dec_combined.astype(bf16), encc_bf, (((1,), (1,)), ((), ())),
            preferred_element_type=jnp.float32,
        )                                                                   # (T, S)
        m = jnp.max(am, axis=-1, keepdims=True)
        e = jnp.exp(am - m)
        denom = jnp.sum(e, axis=-1, keepdims=True)
        score = e * pl.reciprocal(denom, approx=True)                       # softmax over S
        cond = jnp.dot(score.astype(bf16), enckv_bf,
                       preferred_element_type=jnp.float32)                  # (T, E)
        cond = (
            jnp.dot(cond.astype(bf16), wae2h_ref[...],
                    preferred_element_type=jnp.float32)
            + bae2h_ref[...]
        )                                                                   # (T, H)
        conv_input = ((glu + cond) * scale + conv_input) * scale            # residual

    # trailing projections: hid2emd then out (vocab padded to V_pad lanes)
    h = (
        jnp.dot(conv_input.astype(bf16), wh2e_ref[...],
                preferred_element_type=jnp.float32)
        + bh2e_ref[...]
    )                                                                       # (T, E)
    logits = (
        jnp.dot(h.astype(bf16), wout_ref[...],
                preferred_element_type=jnp.float32)
        + bout_ref[...]
    )                                                                       # (T, V_pad)

    if s_pad > S:
        score_out = jnp.concatenate(
            [score, jnp.zeros((T, s_pad - S), jnp.float32)], axis=1)        # (T, S_pad)
    else:
        score_out = score

    # single lane-dense store: [logits | attn] per batch element
    out_ref[0] = jnp.concatenate([logits, score_out], axis=1)


# ----------------------------------------------------------------------------
# Full Decoder forward (single Pallas kernel + plain-JAX glue)
# ----------------------------------------------------------------------------
def decoder_forward(params, trg, enc_conved, enc_combined, *,
                    kernel_size, pad_id, n_layers):
    B, T = trg.shape
    E = params["word_emb"].shape[1]
    H = params["emb2hid_w"].shape[1]
    V = params["out_w"].shape[1]
    S = enc_combined.shape[1]
    K, L = kernel_size, n_layers
    scale = float(np.sqrt(0.5))
    V_pad = _round_up(V, 128)
    S_pad = _round_up(S, 128)
    bf16, f32 = jnp.bfloat16, jnp.float32

    # TODO(synk): embedding lookup (gather) kept in plain JAX, not a Pallas kernel.
    pos = jnp.arange(T)
    embedded = (params["word_emb"][trg] + params["pos_emb"][pos][None, :, :]).astype(f32)

    # Fuse GLU conv weights (a-half || gate-half) into im2col layout:
    # (L, K, H, H) x2 -> (L, K*H, 2H); biases -> (L, 1, 2H).
    convw = jnp.concatenate(
        [params["conv_wa"], params["conv_wb"]], axis=-1).reshape(L, K * H, 2 * H)
    convb = jnp.concatenate(
        [params["conv_ba"], params["conv_bb"]], axis=-1).reshape(L, 1, 2 * H)

    # Zero-pad the vocab projection so the logits store is lane-dense.
    wout = _pad_last(params["out_w"], V_pad)                # (E, V_pad)
    bout = _pad_last(params["out_b"], V_pad).reshape(1, V_pad)

    kernel = functools.partial(
        fused_decoder_kernel,
        n_layers=L, kernel_size=K, hidden=H, seq_t=T, src_s=S,
        s_pad=S_pad, scale=scale, pad_id=float(pad_id),
    )

    perb = lambda b: (b, 0, 0)
    row2 = lambda b: (0, 0)
    row3 = lambda b: (0, 0, 0)

    packed = pl.pallas_call(
        kernel,
        out_shape=jax.ShapeDtypeStruct((B, T, V_pad + S_pad), f32),
        grid=(B,),
        in_specs=[
            pl.BlockSpec((1, T, E), perb),           # embedded
            pl.BlockSpec((1, S, E), perb),           # enc_conved
            pl.BlockSpec((1, S, E), perb),           # enc_combined
            pl.BlockSpec((E, H), row2),              # emb2hid w
            pl.BlockSpec((1, H), row2),              # emb2hid b
            pl.BlockSpec((L, K * H, 2 * H), row3),   # fused conv w
            pl.BlockSpec((L, 1, 2 * H), row3),       # fused conv b
            pl.BlockSpec((H, E), row2),              # att_hid2emd w
            pl.BlockSpec((1, E), row2),
            pl.BlockSpec((E, H), row2),              # att_emb2hid w
            pl.BlockSpec((1, H), row2),
            pl.BlockSpec((H, E), row2),              # hid2emd w
            pl.BlockSpec((1, E), row2),
            pl.BlockSpec((E, V_pad), row2),          # out w (padded)
            pl.BlockSpec((1, V_pad), row2),
        ],
        out_specs=pl.BlockSpec((1, T, V_pad + S_pad), perb),
        compiler_params=pltpu.CompilerParams(
            dimension_semantics=("parallel",),       # shard batch across TCs on v7x
            vmem_limit_bytes=32 * 1024 * 1024,
        ),
    )(
        embedded, enc_conved.astype(f32), enc_combined.astype(f32),
        params["emb2hid_w"].astype(bf16), params["emb2hid_b"].reshape(1, H).astype(f32),
        convw.astype(bf16), convb.astype(f32),
        params["att_h2e_w"].astype(bf16), params["att_h2e_b"].reshape(1, E).astype(f32),
        params["att_e2h_w"].astype(bf16), params["att_e2h_b"].reshape(1, H).astype(f32),
        params["hid2emd_w"].astype(bf16), params["hid2emd_b"].reshape(1, E).astype(f32),
        wout.astype(bf16), bout.astype(f32),
    )

    out = packed[:, :, :V]
    attn = packed[:, :, V_pad:V_pad + S]
    return out, attn


# ----------------------------------------------------------------------------
# Pure-JAX reference (mirrors the PyTorch semantics) for correctness checking
# ----------------------------------------------------------------------------
def decoder_ref(params, trg, enc_conved, enc_combined, *,
                kernel_size, pad_id, n_layers):
    B, T = trg.shape
    H = params["emb2hid_w"].shape[1]
    K = kernel_size
    scale = jnp.float32(np.sqrt(0.5))

    embedded = params["word_emb"][trg] + params["pos_emb"][jnp.arange(T)][None]
    conv_input = embedded @ params["emb2hid_w"] + params["emb2hid_b"]
    enc_kv = enc_conved + enc_combined
    attn = None
    for l in range(n_layers):
        padded = jnp.concatenate(
            [jnp.full((B, K - 1, H), float(pad_id), jnp.float32), conv_input], axis=1)
        a = jnp.zeros((B, T, H), jnp.float32) + params["conv_ba"][l]
        b = jnp.zeros((B, T, H), jnp.float32) + params["conv_bb"][l]
        for k in range(K):
            a = a + padded[:, k:k + T, :] @ params["conv_wa"][l][k]
            b = b + padded[:, k:k + T, :] @ params["conv_wb"][l][k]
        glu = a * jax.nn.sigmoid(b)
        dce = glu @ params["att_h2e_w"] + params["att_h2e_b"]
        dec_combined = (embedded + dce) * scale
        attn_mat = jnp.einsum("bte,bse->bts", dec_combined, enc_combined)
        attn = jax.nn.softmax(attn_mat, axis=-1)
        cond = jnp.einsum("bts,bse->bte", attn, enc_kv)
        cond = cond @ params["att_e2h_w"] + params["att_e2h_b"]
        conv_input = ((glu + cond) * scale + conv_input) * scale
    h = conv_input @ params["hid2emd_w"] + params["hid2emd_b"]
    out = h @ params["out_w"] + params["out_b"]
    return out, attn


# ----------------------------------------------------------------------------
if __name__ == "__main__":
    # Module hyper-params: Decoder(num_embeddings=V, embedding_dims=E,
    #                              n_layers, hidden_size=H, kernel_size=K, pad_id)
    V, E, H, K, n_layers, pad_id = 50, 32, 32, 3, 2, 1
    B, T, S = 2, 8, 10

    key = jax.random.PRNGKey(0)
    ks = jax.random.split(key, 16)

    def nrm(k, shape, s=0.1):
        return jax.random.normal(k, shape, jnp.float32) * s

    params = {
        "word_emb": nrm(ks[0], (V, E), 0.5),
        "pos_emb": nrm(ks[1], (100, E), 0.5),
        "emb2hid_w": nrm(ks[2], (E, H)), "emb2hid_b": nrm(ks[3], (H,)),
        "hid2emd_w": nrm(ks[4], (H, E)), "hid2emd_b": nrm(ks[5], (E,)),
        "att_h2e_w": nrm(ks[6], (H, E)), "att_h2e_b": nrm(ks[7], (E,)),
        "att_e2h_w": nrm(ks[8], (E, H)), "att_e2h_b": nrm(ks[9], (H,)),
        "out_w": nrm(ks[10], (E, V)), "out_b": nrm(ks[11], (V,)),
        # Conv1d(in=H, out=2H, K) split into GLU "a" and gate "b" halves,
        # stored as (layer, K, in=H, out=H).
        "conv_wa": nrm(ks[12], (n_layers, K, H, H)),
        "conv_ba": nrm(ks[13], (n_layers, H)),
        "conv_wb": nrm(ks[14], (n_layers, K, H, H)),
        "conv_bb": nrm(ks[15], (n_layers, H)),
    }

    kt = jax.random.split(jax.random.PRNGKey(1), 3)
    trg = jax.random.randint(kt[0], (B, T), 0, V)                          # (B, T) ids
    enc_conved = jax.random.normal(kt[1], (B, S, E), jnp.float32) * 0.5    # (B, S, E)
    enc_combined = jax.random.normal(kt[2], (B, S, E), jnp.float32) * 0.5  # (B, S, E)

    out, attn = decoder_forward(
        params, trg, enc_conved, enc_combined,
        kernel_size=K, pad_id=pad_id, n_layers=n_layers)
    out, attn = jax.block_until_ready((out, attn))

    out_r, attn_r = decoder_ref(
        params, trg, enc_conved, enc_combined,
        kernel_size=K, pad_id=pad_id, n_layers=n_layers)

    np.testing.assert_allclose(np.asarray(out), np.asarray(out_r), rtol=5e-2, atol=5e-2)
    np.testing.assert_allclose(np.asarray(attn), np.asarray(attn_r), rtol=5e-2, atol=5e-2)
    assert out.shape == (B, T, V) and attn.shape == (B, T, S)
    print("KERNEL_OK")
</pallas_src>

<mosaic_0001>
module attributes {stable_mosaic.version = 11 : i64} {
  func.func @fused_decoder_kernel(%arg0: i32, %arg1: memref<1x8x32xf32, #tpu.memory_space<vmem>>, %arg2: memref<1x10x32xf32, #tpu.memory_space<vmem>>, %arg3: memref<1x10x32xf32, #tpu.memory_space<vmem>>, %arg4: memref<32x32xbf16, #tpu.memory_space<vmem>>, %arg5: memref<1x32xf32, #tpu.memory_space<vmem>>, %arg6: memref<2x96x64xbf16, #tpu.memory_space<vmem>>, %arg7: memref<2x1x64xf32, #tpu.memory_space<vmem>>, %arg8: memref<32x32xbf16, #tpu.memory_space<vmem>>, %arg9: memref<1x32xf32, #tpu.memory_space<vmem>>, %arg10: memref<32x32xbf16, #tpu.memory_space<vmem>>, %arg11: memref<1x32xf32, #tpu.memory_space<vmem>>, %arg12: memref<32x32xbf16, #tpu.memory_space<vmem>>, %arg13: memref<1x32xf32, #tpu.memory_space<vmem>>, %arg14: memref<32x128xbf16, #tpu.memory_space<vmem>>, %arg15: memref<1x128xf32, #tpu.memory_space<vmem>>, %arg16: memref<1x8x256xf32, #tpu.memory_space<vmem>>) attributes {dimension_semantics = [#tpu.dimension_semantics<parallel>], iteration_bounds = array<i64: 2>, scalar_prefetch = 0 : i64, scratch_operands = 0 : i64, tpu.core_type = #tpu.core_type<tc>, window_params = [{transform_indices = @transform_0, window_bounds = array<i64: 1, 8, 32>}, {transform_indices = @transform_1, window_bounds = array<i64: 1, 10, 32>}, {transform_indices = @transform_2, window_bounds = array<i64: 1, 10, 32>}, {pipeline_mode = #tpu.pipeline_mode<synchronous>, transform_indices = @transform_3, window_bounds = array<i64: 32, 32>}, {pipeline_mode = #tpu.pipeline_mode<synchronous>, transform_indices = @transform_4, window_bounds = array<i64: 1, 32>}, {pipeline_mode = #tpu.pipeline_mode<synchronous>, transform_indices = @transform_5, window_bounds = array<i64: 2, 96, 64>}, {pipeline_mode = #tpu.pipeline_mode<synchronous>, transform_indices = @transform_6, window_bounds = array<i64: 2, 1, 64>}, {pipeline_mode = #tpu.pipeline_mode<synchronous>, transform_indices = @transform_7, window_bounds = array<i64: 32, 32>}, {pipeline_mode = #tpu.pipeline_mode<synchronous>, transform_indices = @transform_8, window_bounds = array<i64: 1, 32>}, {pipeline_mode = #tpu.pipeline_mode<synchronous>, transform_indices = @transform_9, window_bounds = array<i64: 32, 32>}, {pipeline_mode = #tpu.pipeline_mode<synchronous>, transform_indices = @transform_10, window_bounds = array<i64: 1, 32>}, {pipeline_mode = #tpu.pipeline_mode<synchronous>, transform_indices = @transform_11, window_bounds = array<i64: 32, 32>}, {pipeline_mode = #tpu.pipeline_mode<synchronous>, transform_indices = @transform_12, window_bounds = array<i64: 1, 32>}, {pipeline_mode = #tpu.pipeline_mode<synchronous>, transform_indices = @transform_13, window_bounds = array<i64: 32, 128>}, {pipeline_mode = #tpu.pipeline_mode<synchronous>, transform_indices = @transform_14, window_bounds = array<i64: 1, 128>}, {transform_indices = @transform_15, window_bounds = array<i64: 1, 8, 256>}]} {
    %c0 = arith.constant 0 : index
    %c0_0 = arith.constant 0 : index
    %c0_1 = arith.constant 0 : index
    %0 = vector.load %arg1[%c0, %c0_0, %c0_1] : memref<1x8x32xf32, #tpu.memory_space<vmem>>, vector<1x8x32xf32>
    %1 = vector.shape_cast %0 : vector<1x8x32xf32> to vector<8x32xf32>
    %2 = arith.truncf %1 : vector<8x32xf32> to vector<8x32xbf16>
    %c0_2 = arith.constant 0 : index
    %c0_3 = arith.constant 0 : index
    %c0_4 = arith.constant 0 : index
    %3 = vector.load %arg3[%c0_2, %c0_3, %c0_4] : memref<1x10x32xf32, #tpu.memory_space<vmem>>, vector<1x10x32xf32>
    %4 = vector.shape_cast %3 : vector<1x10x32xf32> to vector<10x32xf32>
    %5 = arith.truncf %4 : vector<10x32xf32> to vector<10x32xbf16>
    %c0_5 = arith.constant 0 : index
    %c0_6 = arith.constant 0 : index
    %c0_7 = arith.constant 0 : index
    %6 = vector.load %arg2[%c0_5, %c0_6, %c0_7] : memref<1x10x32xf32, #tpu.memory_space<vmem>>, vector<1x10x32xf32>
    %7 = vector.shape_cast %6 : vector<1x10x32xf32> to vector<10x32xf32>
    %8 = arith.addf %7, %4 : vector<10x32xf32>
    %9 = arith.truncf %8 : vector<10x32xf32> to vector<10x32xbf16>
    %c0_8 = arith.constant 0 : index
    %c0_9 = arith.constant 0 : index
    %10 = vector.load %arg4[%c0_8, %c0_9] : memref<32x32xbf16, #tpu.memory_space<vmem>>, vector<32x32xbf16>
    %cst = arith.constant dense<0.000000e+00> : vector<8x32xf32>
    %11 = tpu.matmul %2, %10, %cst {dimension_numbers = #tpu.dot_dimension_numbers<[1], [0], [0], [1], [0, 0, 1, 1], [], []>} : vector<8x32xbf16>, vector<32x32xbf16>, vector<8x32xf32> -> vector<8x32xf32>
    %c0_10 = arith.constant 0 : index
    %c0_11 = arith.constant 0 : index
    %12 = vector.load %arg5[%c0_10, %c0_11] : memref<1x32xf32, #tpu.memory_space<vmem>>, vector<1x32xf32>
    %13 = vector.broadcast %12 : vector<1x32xf32> to vector<8x32xf32>
    %14 = arith.addf %11, %13 : vector<8x32xf32>
    %cst_12 = arith.constant 1.000000e+00 : f32
    %15 = vector.broadcast %cst_12 : f32 to vector<2x32xf32>
    %16 = tpu.concatenate %15, %14 in 0 : vector<2x32xf32>, vector<8x32xf32> -> vector<10x32xf32>
    %17 = vector.extract_strided_slice %16 {offsets = [0, 0], sizes = [8, 32], strides = [1, 1]} : vector<10x32xf32> to vector<8x32xf32>
    %18 = vector.extract_strided_slice %16 {offsets = [1, 0], sizes = [8, 32], strides = [1, 1]} : vector<10x32xf32> to vector<8x32xf32>
    %19 = vector.extract_strided_slice %16 {offsets = [2, 0], sizes = [8, 32], strides = [1, 1]} : vector<10x32xf32> to vector<8x32xf32>
    %20 = tpu.concatenate %17, %18, %19 in 1 : vector<8x32xf32>, vector<8x32xf32>, vector<8x32xf32> -> vector<8x96xf32>
    %21 = arith.truncf %20 : vector<8x96xf32> to vector<8x96xbf16>
    %c0_13 = arith.constant 0 : index
    %c0_14 = arith.constant 0 : index
    %c0_15 = arith.constant 0 : index
    %22 = vector.load %arg6[%c0_13, %c0_14, %c0_15] : memref<2x96x64xbf16, #tpu.memory_space<vmem>>, vector<1x96x64xbf16>
    %23 = vector.shape_cast %22 : vector<1x96x64xbf16> to vector<96x64xbf16>
    %cst_16 = arith.constant dense<0.000000e+00> : vector<8x64xf32>
    %24 = tpu.matmul %21, %23, %cst_16 {dimension_numbers = #tpu.dot_dimension_numbers<[1], [0], [0], [1], [0, 0, 1, 1], [], []>} : vector<8x96xbf16>, vector<96x64xbf16>, vector<8x64xf32> -> vector<8x64xf32>
    %c0_17 = arith.constant 0 : index
    %c0_18 = arith.constant 0 : index
    %c0_19 = arith.constant 0 : index
    %25 = vector.load %arg7[%c0_17, %c0_18, %c0_19] : memref<2x1x64xf32, #tpu.memory_space<vmem>>, vector<1x1x64xf32>
    %26 = vector.shape_cast %25 : vector<1x1x64xf32> to vector<1x64xf32>
    %27 = vector.broadcast %26 : vector<1x64xf32> to vector<8x64xf32>
    %28 = arith.addf %24, %27 : vector<8x64xf32>
    %29 = vector.extract_strided_slice %28 {offsets = [0, 0], sizes = [8, 32], strides = [1, 1]} : vector<8x64xf32> to vector<8x32xf32>
    %30 = vector.extract_strided_slice %28 {offsets = [0, 32], sizes = [8, 32], strides = [1, 1]} : vector<8x64xf32> to vector<8x32xf32>
    %31 = arith.negf %30 : vector<8x32xf32>
    %32 = math.exp %31 : vector<8x32xf32>
    %cst_20 = arith.constant 1.000000e+00 : f32
    %33 = vector.broadcast %cst_20 : f32 to vector<8x32xf32>
    %34 = arith.addf %33, %32 : vector<8x32xf32>
    %35 = arith.divf %33, %34 : vector<8x32xf32>
    %36 = arith.mulf %29, %35 : vector<8x32xf32>
    %37 = arith.truncf %36 : vector<8x32xf32> to vector<8x32xbf16>
    %c0_21 = arith.constant 0 : index
    %c0_22 = arith.constant 0 : index
    %38 = vector.load %arg8[%c0_21, %c0_22] : memref<32x32xbf16, #tpu.memory_space<vmem>>, vector<32x32xbf16>
    %cst_23 = arith.constant dense<0.000000e+00> : vector<8x32xf32>
    %39 = tpu.matmul %37, %38, %cst_23 {dimension_numbers = #tpu.dot_dimension_numbers<[1], [0], [0], [1], [0, 0, 1, 1], [], []>} : vector<8x32xbf16>, vector<32x32xbf16>, vector<8x32xf32> -> vector<8x32xf32>
    %c0_24 = arith.constant 0 : index
    %c0_25 = arith.constant 0 : index
    %40 = vector.load %arg9[%c0_24, %c0_25] : memref<1x32xf32, #tpu.memory_space<vmem>>, vector<1x32xf32>
    %41 = vector.broadcast %40 : vector<1x32xf32> to vector<8x32xf32>
    %42 = arith.addf %39, %41 : vector<8x32xf32>
    %43 = arith.addf %1, %42 : vector<8x32xf32>
    %cst_26 = arith.constant 0.707106769 : f32
    %44 = vector.broadcast %cst_26 : f32 to vector<8x32xf32>
    %45 = arith.mulf %43, %44 : vector<8x32xf32>
    %46 = arith.truncf %45 : vector<8x32xf32> to vector<8x32xbf16>
    %cst_27 = arith.constant dense<0.000000e+00> : vector<8x10xf32>
    %47 = tpu.matmul %46, %5, %cst_27 {dimension_numbers = #tpu.dot_dimension_numbers<[1], [1], [0], [0], [0, 0, 1, 0], [], []>} : vector<8x32xbf16>, vector<10x32xbf16>, vector<8x10xf32> -> vector<8x10xf32>
    %cst_28 = arith.constant dense<0xFF800000> : vector<8xf32>
    %48 = vector.multi_reduction <maximumf>, %47, %cst_28 [1] : vector<8x10xf32> to vector<8xf32>
    %49 = vector.shape_cast %48 : vector<8xf32> to vector<8x1xf32>
    %50 = vector.broadcast %49 : vector<8x1xf32> to vector<8x10xf32>
    %51 = arith.subf %47, %50 : vector<8x10xf32>
    %52 = math.exp %51 : vector<8x10xf32>
    %cst_29 = arith.constant dense<0.000000e+00> : vector<8xf32>
    %53 = vector.multi_reduction <add>, %52, %cst_29 [1] : vector<8x10xf32> to vector<8xf32>
    %54 = vector.shape_cast %53 : vector<8xf32> to vector<8x1xf32>
    %55 = tpu.reciprocal %54 {approx = true} : vector<8x1xf32> -> vector<8x1xf32>
    %56 = vector.broadcast %55 : vector<8x1xf32> to vector<8x10xf32>
    %57 = arith.mulf %52, %56 : vector<8x10xf32>
    %58 = arith.truncf %57 : vector<8x10xf32> to vector<8x10xbf16>
    %cst_30 = arith.constant dense<0.000000e+00> : vector<8x32xf32>
    %59 = tpu.matmul %58, %9, %cst_30 {dimension_numbers = #tpu.dot_dimension_numbers<[1], [0], [0], [1], [0, 0, 1, 1], [], []>} : vector<8x10xbf16>, vector<10x32xbf16>, vector<8x32xf32> -> vector<8x32xf32>
    %60 = arith.truncf %59 : vector<8x32xf32> to vector<8x32xbf16>
    %c0_31 = arith.constant 0 : index
    %c0_32 = arith.constant 0 : index
    %61 = vector.load %arg10[%c0_31, %c0_32] : memref<32x32xbf16, #tpu.memory_space<vmem>>, vector<32x32xbf16>
    %cst_33 = arith.constant dense<0.000000e+00> : vector<8x32xf32>
    %62 = tpu.matmul %60, %61, %cst_33 {dimension_numbers = #tpu.dot_dimension_numbers<[1], [0], [0], [1], [0, 0, 1, 1], [], []>} : vector<8x32xbf16>, vector<32x32xbf16>, vector<8x32xf32> -> vector<8x32xf32>
    %c0_34 = arith.constant 0 : index
    %c0_35 = arith.constant 0 : index
    %63 = vector.load %arg11[%c0_34, %c0_35] : memref<1x32xf32, #tpu.memory_space<vmem>>, vector<1x32xf32>
    %64 = vector.broadcast %63 : vector<1x32xf32> to vector<8x32xf32>
    %65 = arith.addf %62, %64 : vector<8x32xf32>
    %66 = arith.addf %36, %65 : vector<8x32xf32>
    %cst_36 = arith.constant 0.707106769 : f32
    %67 = vector.broadcast %cst_36 : f32 to vector<8x32xf32>
    %68 = arith.mulf %66, %67 : vector<8x32xf32>
    %69 = arith.addf %68, %14 : vector<8x32xf32>
    %cst_37 = arith.constant 0.707106769 : f32
    %70 = vector.broadcast %cst_37 : f32 to vector<8x32xf32>
    %71 = arith.mulf %69, %70 : vector<8x32xf32>
    %72 = tpu.concatenate %15, %71 in 0 : vector<2x32xf32>, vector<8x32xf32> -> vector<10x32xf32>
    %73 = vector.extract_strided_slice %72 {offsets = [0, 0], sizes = [8, 32], strides = [1, 1]} : vector<10x32xf32> to vector<8x32xf32>
    %74 = vector.extract_strided_slice %72 {offsets = [1, 0], sizes = [8, 32], strides = [1, 1]} : vector<10x32xf32> to vector<8x32xf32>
    %75 = vector.extract_strided_slice %72 {offsets = [2, 0], sizes = [8, 32], strides = [1, 1]} : vector<10x32xf32> to vector<8x32xf32>
    %76 = tpu.concatenate %73, %74, %75 in 1 : vector<8x32xf32>, vector<8x32xf32>, vector<8x32xf32> -> vector<8x96xf32>
    %77 = arith.truncf %76 : vector<8x96xf32> to vector<8x96xbf16>
    %c1 = arith.constant 1 : index
    %c0_38 = arith.constant 0 : index
    %c0_39 = arith.constant 0 : index
    %78 = vector.load %arg6[%c1, %c0_38, %c0_39] : memref<2x96x64xbf16, #tpu.memory_space<vmem>>, vector<1x96x64xbf16>
    %79 = vector.shape_cast %78 : vector<1x96x64xbf16> to vector<96x64xbf16>
    %cst_40 = arith.constant dense<0.000000e+00> : vector<8x64xf32>
    %80 = tpu.matmul %77, %79, %cst_40 {dimension_numbers = #tpu.dot_dimension_numbers<[1], [0], [0], [1], [0, 0, 1, 1], [], []>} : vector<8x96xbf16>, vector<96x64xbf16>, vector<8x64xf32> -> vector<8x64xf32>
    %c1_41 = arith.constant 1 : index
    %c0_42 = arith.constant 0 : index
    %c0_43 = arith.constant 0 : index
    %81 = vector.load %arg7[%c1_41, %c0_42, %c0_43] : memref<2x1x64xf32, #tpu.memory_space<vmem>>, vector<1x1x64xf32>
    %82 = vector.shape_cast %81 : vector<1x1x64xf32> to vector<1x64xf32>
    %83 = vector.broadcast %82 : vector<1x64xf32> to vector<8x64xf32>
    %84 = arith.addf %80, %83 : vector<8x64xf32>
    %85 = vector.extract_strided_slice %84 {offsets = [0, 0], sizes = [8, 32], strides = [1, 1]} : vector<8x64xf32> to vector<8x32xf32>
    %86 = vector.extract_strided_slice %84 {offsets = [0, 32], sizes = [8, 32], strides = [1, 1]} : vector<8x64xf32> to vector<8x32xf32>
    %87 = arith.negf %86 : vector<8x32xf32>
    %88 = math.exp %87 : vector<8x32xf32>
    %cst_44 = arith.constant 1.000000e+00 : f32
    %89 = vector.broadcast %cst_44 : f32 to vector<8x32xf32>
    %90 = arith.addf %89, %88 : vector<8x32xf32>
    %91 = arith.divf %89, %90 : vector<8x32xf32>
    %92 = arith.mulf %85, %91 : vector<8x32xf32>
    %93 = arith.truncf %92 : vector<8x32xf32> to vector<8x32xbf16>
    %c0_45 = arith.constant 0 : index
    %c0_46 = arith.constant 0 : index
    %94 = vector.load %arg8[%c0_45, %c0_46] : memref<32x32xbf16, #tpu.memory_space<vmem>>, vector<32x32xbf16>
    %cst_47 = arith.constant dense<0.000000e+00> : vector<8x32xf32>
    %95 = tpu.matmul %93, %94, %cst_47 {dimension_numbers = #tpu.dot_dimension_numbers<[1], [0], [0], [1], [0, 0, 1, 1], [], []>} : vector<8x32xbf16>, vector<32x32xbf16>, vector<8x32xf32> -> vector<8x32xf32>
    %c0_48 = arith.constant 0 : index
    %c0_49 = arith.constant 0 : index
    %96 = vector.load %arg9[%c0_48, %c0_49] : memref<1x32xf32, #tpu.memory_space<vmem>>, vector<1x32xf32>
    %97 = vector.broadcast %96 : vector<1x32xf32> to vector<8x32xf32>
    %98 = arith.addf %95, %97 : vector<8x32xf32>
    %99 = arith.addf %1, %98 : vector<8x32xf32>
    %cst_50 = arith.constant 0.707106769 : f32
    %100 = vector.broadcast %cst_50 : f32 to vector<8x32xf32>
    %101 = arith.mulf %99, %100 : vector<8x32xf32>
    %102 = arith.truncf %101 : vector<8x32xf32> to vector<8x32xbf16>
    %cst_51 = arith.constant dense<0.000000e+00> : vector<8x10xf32>
    %103 = tpu.matmul %102, %5, %cst_51 {dimension_numbers = #tpu.dot_dimension_numbers<[1], [1], [0], [0], [0, 0, 1, 0], [], []>} : vector<8x32xbf16>, vector<10x32xbf16>, vector<8x10xf32> -> vector<8x10xf32>
    %cst_52 = arith.constant dense<0xFF800000> : vector<8xf32>
    %104 = vector.multi_reduction <maximumf>, %103, %cst_52 [1] : vector<8x10xf32> to vector<8xf32>
    %105 = vector.shape_cast %104 : vector<8xf32> to vector<8x1xf32>
    %106 = vector.broadcast %105 : vector<8x1xf32> to vector<8x10xf32>
    %107 = arith.subf %103, %106 : vector<8x10xf32>
    %108 = math.exp %107 : vector<8x10xf32>
    %cst_53 = arith.constant dense<0.000000e+00> : vector<8xf32>
    %109 = vector.multi_reduction <add>, %108, %cst_53 [1] : vector<8x10xf32> to vector<8xf32>
    %110 = vector.shape_cast %109 : vector<8xf32> to vector<8x1xf32>
    %111 = tpu.reciprocal %110 {approx = true} : vector<8x1xf32> -> vector<8x1xf32>
    %112 = vector.broadcast %111 : vector<8x1xf32> to vector<8x10xf32>
    %113 = arith.mulf %108, %112 : vector<8x10xf32>
    %114 = arith.truncf %113 : vector<8x10xf32> to vector<8x10xbf16>
    %cst_54 = arith.constant dense<0.000000e+00> : vector<8x32xf32>
    %115 = tpu.matmul %114, %9, %cst_54 {dimension_numbers = #tpu.dot_dimension_numbers<[1], [0], [0], [1], [0, 0, 1, 1], [], []>} : vector<8x10xbf16>, vector<10x32xbf16>, vector<8x32xf32> -> vector<8x32xf32>
    %116 = arith.truncf %115 : vector<8x32xf32> to vector<8x32xbf16>
    %c0_55 = arith.constant 0 : index
    %c0_56 = arith.constant 0 : index
    %117 = vector.load %arg10[%c0_55, %c0_56] : memref<32x32xbf16, #tpu.memory_space<vmem>>, vector<32x32xbf16>
    %cst_57 = arith.constant dense<0.000000e+00> : vector<8x32xf32>
    %118 = tpu.matmul %116, %117, %cst_57 {dimension_numbers = #tpu.dot_dimension_numbers<[1], [0], [0], [1], [0, 0, 1, 1], [], []>} : vector<8x32xbf16>, vector<32x32xbf16>, vector<8x32xf32> -> vector<8x32xf32>
    %c0_58 = arith.constant 0 : index
    %c0_59 = arith.constant 0 : index
    %119 = vector.load %arg11[%c0_58, %c0_59] : memref<1x32xf32, #tpu.memory_space<vmem>>, vector<1x32xf32>
    %120 = vector.broadcast %119 : vector<1x32xf32> to vector<8x32xf32>
    %121 = arith.addf %118, %120 : vector<8x32xf32>
    %122 = arith.addf %92, %121 : vector<8x32xf32>
    %cst_60 = arith.constant 0.707106769 : f32
    %123 = vector.broadcast %cst_60 : f32 to vector<8x32xf32>
    %124 = arith.mulf %122, %123 : vector<8x32xf32>
    %125 = arith.addf %124, %71 : vector<8x32xf32>
    %cst_61 = arith.constant 0.707106769 : f32
    %126 = vector.broadcast %cst_61 : f32 to vector<8x32xf32>
    %127 = arith.mulf %125, %126 : vector<8x32xf32>
    %128 = arith.truncf %127 : vector<8x32xf32> to vector<8x32xbf16>
    %c0_62 = arith.constant 0 : index
    %c0_63 = arith.constant 0 : index
    %129 = vector.load %arg12[%c0_62, %c0_63] : memref<32x32xbf16, #tpu.memory_space<vmem>>, vector<32x32xbf16>
    %cst_64 = arith.constant dense<0.000000e+00> : vector<8x32xf32>
    %130 = tpu.matmul %128, %129, %cst_64 {dimension_numbers = #tpu.dot_dimension_numbers<[1], [0], [0], [1], [0, 0, 1, 1], [], []>} : vector<8x32xbf16>, vector<32x32xbf16>, vector<8x32xf32> -> vector<8x32xf32>
    %c0_65 = arith.constant 0 : index
    %c0_66 = arith.constant 0 : index
    %131 = vector.load %arg13[%c0_65, %c0_66] : memref<1x32xf32, #tpu.memory_space<vmem>>, vector<1x32xf32>
    %132 = vector.broadcast %131 : vector<1x32xf32> to vector<8x32xf32>
    %133 = arith.addf %130, %132 : vector<8x32xf32>
    %134 = arith.truncf %133 : vector<8x32xf32> to vector<8x32xbf16>
    %c0_67 = arith.constant 0 : index
    %c0_68 = arith.constant 0 : index
    %135 = vector.load %arg14[%c0_67, %c0_68] : memref<32x128xbf16, #tpu.memory_space<vmem>>, vector<32x128xbf16>
    %cst_69 = arith.constant dense<0.000000e+00> : vector<8x128xf32>
    %136 = tpu.matmul %134, %135, %cst_69 {dimension_numbers = #tpu.dot_dimension_numbers<[1], [0], [0], [1], [0, 0, 1, 1], [], []>} : vector<8x32xbf16>, vector<32x128xbf16>, vector<8x128xf32> -> vector<8x128xf32>
    %c0_70 = arith.constant 0 : index
    %c0_71 = arith.constant 0 : index
    %137 = vector.load %arg15[%c0_70, %c0_71] : memref<1x128xf32, #tpu.memory_space<vmem>>, vector<1x128xf32>
    %138 = vector.broadcast %137 : vector<1x128xf32> to vector<8x128xf32>
    %139 = arith.addf %136, %138 : vector<8x128xf32>
    %cst_72 = arith.constant 0.000000e+00 : f32
    %140 = vector.broadcast %cst_72 : f32 to vector<8x118xf32>
    %141 = tpu.concatenate %113, %140 in 1 : vector<8x10xf32>, vector<8x118xf32> -> vector<8x128xf32>
    %142 = tpu.concatenate %139, %141 in 1 : vector<8x128xf32>, vector<8x128xf32> -> vector<8x256xf32>
    %c0_73 = arith.constant 0 : index
    %c0_74 = arith.constant 0 : index
    %c0_75 = arith.constant 0 : index
    %143 = vector.load %arg16[%c0_73, %c0_74, %c0_75] : memref<1x8x256xf32, #tpu.memory_space<vmem>>, vector<1x8x256xf32>
    %144 = vector.shape_cast %143 : vector<1x8x256xf32> to vector<8x256xf32>
    %145 = vector.shape_cast %142 : vector<8x256xf32> to vector<1x8x256xf32>
    tpu.vector_store %arg16[%c0_73, %c0_74, %c0_75], %145 {strides = array<i32>} : memref<1x8x256xf32, #tpu.memory_space<vmem>>, vector<1x8x256xf32>,
    return
  }
  func.func @transform_0(%arg0: i32) -> (i32, i32, i32) {
    %c0_i32 = arith.constant 0 : i32
    %c0_i32_0 = arith.constant 0 : i32
    %c0_i32_1 = arith.constant 0 : i32
    return %arg0, %c0_i32, %c0_i32_0 : i32, i32, i32
  }
  func.func @transform_1(%arg0: i32) -> (i32, i32, i32) {
    %c0_i32 = arith.constant 0 : i32
    %c0_i32_0 = arith.constant 0 : i32
    %c0_i32_1 = arith.constant 0 : i32
    return %arg0, %c0_i32, %c0_i32_0 : i32, i32, i32
  }
  func.func @transform_2(%arg0: i32) -> (i32, i32, i32) {
    %c0_i32 = arith.constant 0 : i32
    %c0_i32_0 = arith.constant 0 : i32
    %c0_i32_1 = arith.constant 0 : i32
    return %arg0, %c0_i32, %c0_i32_0 : i32, i32, i32
  }
  func.func @transform_3(%arg0: i32) -> (i32, i32) {
    %c0_i32 = arith.constant 0 : i32
    %c0_i32_0 = arith.constant 0 : i32
    %c0_i32_1 = arith.constant 0 : i32
    return %c0_i32, %c0_i32_0 : i32, i32
  }
  func.func @transform_4(%arg0: i32) -> (i32, i32) {
    %c0_i32 = arith.constant 0 : i32
    %c0_i32_0 = arith.constant 0 : i32
    %c0_i32_1 = arith.constant 0 : i32
    return %c0_i32, %c0_i32_0 : i32, i32
  }
  func.func @transform_5(%arg0: i32) -> (i32, i32, i32) {
    %c0_i32 = arith.constant 0 : i32
    %c0_i32_0 = arith.constant 0 : i32
    %c0_i32_1 = arith.constant 0 : i32
    %c0_i32_2 = arith.constant 0 : i32
    return %c0_i32, %c0_i32_0, %c0_i32_1 : i32, i32, i32
  }
  func.func @transform_6(%arg0: i32) -> (i32, i32, i32) {
    %c0_i32 = arith.constant 0 : i32
    %c0_i32_0 = arith.constant 0 : i32
    %c0_i32_1 = arith.constant 0 : i32
    %c0_i32_2 = arith.constant 0 : i32
    return %c0_i32, %c0_i32_0, %c0_i32_1 : i32, i32, i32
  }
  func.func @transform_7(%arg0: i32) -> (i32, i32) {
    %c0_i32 = arith.constant 0 : i32
    %c0_i32_0 = arith.constant 0 : i32
    %c0_i32_1 = arith.constant 0 : i32
    return %c0_i32, %c0_i32_0 : i32, i32
  }
  func.func @transform_8(%arg0: i32) -> (i32, i32) {
    %c0_i32 = arith.constant 0 : i32
    %c0_i32_0 = arith.constant 0 : i32
    %c0_i32_1 = arith.constant 0 : i32
    return %c0_i32, %c0_i32_0 : i32, i32
  }
  func.func @transform_9(%arg0: i32) -> (i32, i32) {
    %c0_i32 = arith.constant 0 : i32
    %c0_i32_0 = arith.constant 0 : i32
    %c0_i32_1 = arith.constant 0 : i32
    return %c0_i32, %c0_i32_0 : i32, i32
  }
  func.func @transform_10(%arg0: i32) -> (i32, i32) {
    %c0_i32 = arith.constant 0 : i32
    %c0_i32_0 = arith.constant 0 : i32
    %c0_i32_1 = arith.constant 0 : i32
    return %c0_i32, %c0_i32_0 : i32, i32
  }
  func.func @transform_11(%arg0: i32) -> (i32, i32) {
    %c0_i32 = arith.constant 0 : i32
    %c0_i32_0 = arith.constant 0 : i32
    %c0_i32_1 = arith.constant 0 : i32
    return %c0_i32, %c0_i32_0 : i32, i32
  }
  func.func @transform_12(%arg0: i32) -> (i32, i32) {
    %c0_i32 = arith.constant 0 : i32
    %c0_i32_0 = arith.constant 0 : i32
    %c0_i32_1 = arith.constant 0 : i32
    return %c0_i32, %c0_i32_0 : i32, i32
  }
  func.func @transform_13(%arg0: i32) -> (i32, i32) {
    %c0_i32 = arith.constant 0 : i32
    %c0_i32_0 = arith.constant 0 : i32
    %c0_i32_1 = arith.constant 0 : i32
    return %c0_i32, %c0_i32_0 : i32, i32
  }
  func.func @transform_14(%arg0: i32) -> (i32, i32) {
    %c0_i32 = arith.constant 0 : i32
    %c0_i32_0 = arith.constant 0 : i32
    %c0_i32_1 = arith.constant 0 : i32
    return %c0_i32, %c0_i32_0 : i32, i32
  }
  func.func @transform_15(%arg0: i32) -> (i32, i32, i32) {
    %c0_i32 = arith.constant 0 : i32
    %c0_i32_0 = arith.constant 0 : i32
    %c0_i32_1 = arith.constant 0 : i32
    return %arg0, %c0_i32, %c0_i32_0 : i32, i32, i32
  }
}

</mosaic_0001>

<llo_original>
// kernel: tpu_custom_call.1
$region0: #{tpu_custom_call.1}
  #allocation0 [shape = 'u32[]', space=smem, size = 0x4, offset = 0x4, fixed_abs, tag = 'smem constant byte address 0x4 - core index']
  #allocation1 [shape = 'u32[144,128]{1,0:T(1,128)}', space=vmem, size = 0x12000, scoped, tag = 'internal scratch']
  %s0 = inlined_call_operand.vmem [shape: f32[2,8,32], index: 0, kind: input, shape index: {}]
  %s1 = inlined_call_operand.vmem [shape: f32[2,10,32], index: 1, kind: input, shape index: {}]
  %s2 = inlined_call_operand.vmem [shape: f32[2,10,32], index: 2, kind: input, shape index: {}]
  %s3 = inlined_call_operand.vmem [shape: bf16[32,32], index: 3, kind: input, shape index: {}]
  %s4 = inlined_call_operand.vmem [shape: f32[1,32], index: 4, kind: input, shape index: {}]
  %s5 = inlined_call_operand.vmem [shape: bf16[2,96,64], index: 5, kind: input, shape index: {}]
  %s6 = inlined_call_operand.vmem [shape: f32[2,1,64], index: 6, kind: input, shape index: {}]
  %s7 = inlined_call_operand.vmem [shape: bf16[32,32], index: 7, kind: input, shape index: {}]
  %s8 = inlined_call_operand.vmem [shape: f32[1,32], index: 8, kind: input, shape index: {}]
  %s9 = inlined_call_operand.vmem [shape: bf16[32,32], index: 9, kind: input, shape index: {}]
  %s10 = inlined_call_operand.vmem [shape: f32[1,32], index: 10, kind: input, shape index: {}]
  %s11 = inlined_call_operand.vmem [shape: bf16[32,32], index: 11, kind: input, shape index: {}]
  %s12 = inlined_call_operand.vmem [shape: f32[1,32], index: 12, kind: input, shape index: {}]
  %s13 = inlined_call_operand.vmem [shape: bf16[32,128], index: 13, kind: input, shape index: {}]
  %s14 = inlined_call_operand.vmem [shape: f32[1,128], index: 14, kind: input, shape index: {}]
  %s15 = inlined_call_operand.hbm [shape: f32[2,8,256], index: 15, kind: output, shape index: {}]
  %s16 = sld [smem:[#allocation0]]
  $region93: #{tpu_custom_call.1} parent=0
    _
  %s18 = ssub.s32 1, %s16
  %s19 = scalar_select 0, %s18, %s16
  $region1: #{tpu_custom_call.1} parent=0
    #allocation2 [shape = 'u8[16384]{0}', space=vmem, size = 0x4000, scoped, tag = 'output window, operand 0']
    #allocation3 [shape = 's32[2]{0}', space=sflag, size = 0x8, scoped, tag = 'scoped memory for tpu_custom_call.1']
    %20 = vsyncpa [#allocation3], 0
    %s21 = scalar_lea.sflag [#allocation3], 1
    %22 = vsyncpa %s21, 0
    loop: start=0, step=1, limit=4
    $region2: #{tpu_custom_call.1} parent=1 // loop_pre_header
      _
    $region3: #{tpu_custom_call.1} parent=1 // loop_header
      %s24 = sphi 0, %s28
      %p25 = scmp.ge.s32.totalorder %s24, 4
      %s34 = sphi 0, %s36
      %s37 = sphi 0, %s34
      %s38 = sphi 0, %s37
      %s54 = sphi 0, %s38
      %s60 = sphi 0, %s62
      %s63 = sphi 0, %s60
      %s64 = sphi 0, %s63
      %s80 = sphi 0, %s64
      %s86 = sphi 0, %s88
      %s89 = sphi 0, %s86
      %s90 = sphi 0, %s89
      %s106 = sphi 0, %s90
      %s110 = sphi 0, %s110
      %s112 = sphi 0, %s110
      %s113 = sphi 0, %s112
      %s127 = sphi 0, %s113
      %s131 = sphi 0, %s131
      %s133 = sphi 0, %s131
      %s134 = sphi 0, %s133
      %s148 = sphi 0, %s134
      %s152 = sphi 0, %s152
      %s154 = sphi 0, %s152
      %s155 = sphi 0, %s154
      %s169 = sphi 0, %s155
      %s173 = sphi 0, %s173
      %s175 = sphi 0, %s173
      %s176 = sphi 0, %s175
      %s190 = sphi 0, %s176
      %s194 = sphi 0, %s194
      %s196 = sphi 0, %s194
      %s197 = sphi 0, %s196
      %s211 = sphi 0, %s197
      %s215 = sphi 0, %s215
      %s217 = sphi 0, %s215
      %s218 = sphi 0, %s217
      %s232 = sphi 0, %s218
      %s236 = sphi 0, %s236
      %s238 = sphi 0, %s236
      %s239 = sphi 0, %s238
      %s253 = sphi 0, %s239
      %s257 = sphi 0, %s257
      %s259 = sphi 0, %s257
      %s260 = sphi 0, %s259
      %s274 = sphi 0, %s260
      %s278 = sphi 0, %s278
      %s280 = sphi 0, %s278
      %s281 = sphi 0, %s280
      %s295 = sphi 0, %s281
      %s299 = sphi 0, %s299
      %s301 = sphi 0, %s299
      %s302 = sphi 0, %s301
      %s316 = sphi 0, %s302
      %s320 = sphi 0, %s320
      %s322 = sphi 0, %s320
      %s323 = sphi 0, %s322
      %s337 = sphi 0, %s323
      %s341 = sphi 0, %s341
      %s343 = sphi 0, %s341
      %s344 = sphi 0, %s343
      %s358 = sphi 0, %s344
      %s364 = sphi 0, %s366
      %s367 = sphi 0, %s364
      %s368 = sphi 0, %s367
      %s384 = sphi 0, %s368
    $region4: #{tpu_custom_call.1} parent=1 // loop_header_branch
      %27 = sbr.rel (%p25) target = $region8
    $region5: #{tpu_custom_call.1} parent=1 // loop_body
      %s29 = ssub.s32 %s24, 1
      %s30 = ssub.s32 %s24, 2
      %s31 = sadd.s32 %s24, 1
      %s32 = ssub.s32 %s24, %s31
      %p33 = scmp.eq.s32.totalorder %s32, 0
      %s35 = sadd.s32 %s34, 1
      %s36 = scalar_select %p33, %s34, %s35
      %p39 = pneg %p33
      %p40 = scmp.eq.s32.totalorder %s24, 1
      %p41 = por %p39, %p40
      %p42 = scmp.ne.s32.totalorder %s34, %s37
      %p43 = scmp.eq.s32.totalorder %s24, 0
      %p44 = por %p42, %p43
      %p45 = scmp.ne.s32.totalorder %s34, %s37
      %p46 = scmp.eq.s32.totalorder %s29, 1
      %p47 = por %p45, %p46
      %p48 = scmp.ne.s32.totalorder %s37, %s38
      %p49 = scmp.eq.s32.totalorder %s29, 0
      %p50 = por %p48, %p49
      %p51 = scmp.ne.s32.totalorder %s37, %s38
      %p52 = scmp.eq.s32.totalorder %s30, 1
      %p53 = por %p51, %p52
      %p55 = scmp.ne.s32.totalorder %s38, %s54
      %p56 = scmp.eq.s32.totalorder %s30, 0
      %p57 = por %p55, %p56
      %s58 = ssub.s32 %s24, %s31
      %p59 = scmp.eq.s32.totalorder %s58, 0
      %s61 = sadd.s32 %s60, 1
      %s62 = scalar_select %p59, %s60, %s61
      %p65 = pneg %p59
      %p66 = scmp.eq.s32.totalorder %s24, 1
      %p67 = por %p65, %p66
      %p68 = scmp.ne.s32.totalorder %s60, %s63
      %p69 = scmp.eq.s32.totalorder %s24, 0
      %p70 = por %p68, %p69
      %p71 = scmp.ne.s32.totalorder %s60, %s63
      %p72 = scmp.eq.s32.totalorder %s29, 1
      %p73 = por %p71, %p72
      %p74 = scmp.ne.s32.totalorder %s63, %s64
      %p75 = scmp.eq.s32.totalorder %s29, 0
      %p76 = por %p74, %p75
      %p77 = scmp.ne.s32.totalorder %s63, %s64
      %p78 = scmp.eq.s32.totalorder %s30, 1
      %p79 = por %p77, %p78
      %p81 = scmp.ne.s32.totalorder %s64, %s80
      %p82 = scmp.eq.s32.totalorder %s30, 0
      %p83 = por %p81, %p82
      %s84 = ssub.s32 %s24, %s31
      %p85 = scmp.eq.s32.totalorder %s84, 0
      %s87 = sadd.s32 %s86, 1
      %s88 = scalar_select %p85, %s86, %s87
      %p91 = pneg %p85
      %p92 = scmp.eq.s32.totalorder %s24, 1
      %p93 = por %p91, %p92
      %p94 = scmp.ne.s32.totalorder %s86, %s89
      %p95 = scmp.eq.s32.totalorder %s24, 0
      %p96 = por %p94, %p95
      %p97 = scmp.ne.s32.totalorder %s86, %s89
      %p98 = scmp.eq.s32.totalorder %s29, 1
      %p99 = por %p97, %p98
      %p100 = scmp.ne.s32.totalorder %s89, %s90
      %p101 = scmp.eq.s32.totalorder %s29, 0
      %p102 = por %p100, %p101
      %p103 = scmp.ne.s32.totalorder %s89, %s90
      %p104 = scmp.eq.s32.totalorder %s30, 1
      %p105 = por %p103, %p104
      %p107 = scmp.ne.s32.totalorder %s90, %s106
      %p108 = scmp.eq.s32.totalorder %s30, 0
      %p109 = por %p107, %p108
      %s111 = sadd.s32 %s110, 1
      %p114 = scmp.eq.s32.totalorder %s24, 1
      %p115 = scmp.ne.s32.totalorder %s110, %s112
      %p116 = scmp.eq.s32.totalorder %s24, 0
      %p117 = por %p115, %p116
      %p118 = scmp.ne.s32.totalorder %s110, %s112
      %p119 = scmp.eq.s32.totalorder %s29, 1
      %p120 = por %p118, %p119
      %p121 = scmp.ne.s32.totalorder %s112, %s113
      %p122 = scmp.eq.s32.totalorder %s29, 0
      %p123 = por %p121, %p122
      %p124 = scmp.ne.s32.totalorder %s112, %s113
      %p125 = scmp.eq.s32.totalorder %s30, 1
      %p126 = por %p124, %p125
      %p128 = scmp.ne.s32.totalorder %s113, %s127
      %p129 = scmp.eq.s32.totalorder %s30, 0
      %p130 = por %p128, %p129
      %s132 = sadd.s32 %s131, 1
      %p135 = scmp.eq.s32.totalorder %s24, 1
      %p136 = scmp.ne.s32.totalorder %s131, %s133
      %p137 = scmp.eq.s32.totalorder %s24, 0
      %p138 = por %p136, %p137
      %p139 = scmp.ne.s32.totalorder %s131, %s133
      %p140 = scmp.eq.s32.totalorder %s29, 1
      %p141 = por %p139, %p140
      %p142 = scmp.ne.s32.totalorder %s133, %s134
      %p143 = scmp.eq.s32.totalorder %s29, 0
      %p144 = por %p142, %p143
      %p145 = scmp.ne.s32.totalorder %s133, %s134
      %p146 = scmp.eq.s32.totalorder %s30, 1
      %p147 = por %p145, %p146
      %p149 = scmp.ne.s32.totalorder %s134, %s148
      %p150 = scmp.eq.s32.totalorder %s30, 0
      %p151 = por %p149, %p150
      %s153 = sadd.s32 %s152, 1
      %p156 = scmp.eq.s32.totalorder %s24, 1
      %p157 = scmp.ne.s32.totalorder %s152, %s154
      %p158 = scmp.eq.s32.totalorder %s24, 0
      %p159 = por %p157, %p158
      %p160 = scmp.ne.s32.totalorder %s152, %s154
      %p161 = scmp.eq.s32.totalorder %s29, 1
      %p162 = por %p160, %p161
      %p163 = scmp.ne.s32.totalorder %s154, %s155
      %p164 = scmp.eq.s32.totalorder %s29, 0
      %p165 = por %p163, %p164
      %p166 = scmp.ne.s32.totalorder %s154, %s155
      %p167 = scmp.eq.s32.totalorder %s30, 1
      %p168 = por %p166, %p167
      %p170 = scmp.ne.s32.totalorder %s155, %s169
      %p171 = scmp.eq.s32.totalorder %s30, 0
      %p172 = por %p170, %p171
      %s174 = sadd.s32 %s173, 1
      %p177 = scmp.eq.s32.totalorder %s24, 1
      %p178 = scmp.ne.s32.totalorder %s173, %s175
      %p179 = scmp.eq.s32.totalorder %s24, 0
      %p180 = por %p178, %p179
      %p181 = scmp.ne.s32.totalorder %s173, %s175
      %p182 = scmp.eq.s32.totalorder %s29, 1
      %p183 = por %p181, %p182
      %p184 = scmp.ne.s32.totalorder %s175, %s176
      %p185 = scmp.eq.s32.totalorder %s29, 0
      %p186 = por %p184, %p185
      %p187 = scmp.ne.s32.totalorder %s175, %s176
      %p188 = scmp.eq.s32.totalorder %s30, 1
      %p189 = por %p187, %p188
      %p191 = scmp.ne.s32.totalorder %s176, %s190
      %p192 = scmp.eq.s32.totalorder %s30, 0
      %p193 = por %p191, %p192
      %s195 = sadd.s32 %s194, 1
      %p198 = scmp.eq.s32.totalorder %s24, 1
      %p199 = scmp.ne.s32.totalorder %s194, %s196
      %p200 = scmp.eq.s32.totalorder %s24, 0
      %p201 = por %p199, %p200
      %p202 = scmp.ne.s32.totalorder %s194, %s196
      %p203 = scmp.eq.s32.totalorder %s29, 1
      %p204 = por %p202, %p203
      %p205 = scmp.ne.s32.totalorder %s196, %s197
      %p206 = scmp.eq.s32.totalorder %s29, 0
      %p207 = por %p205, %p206
      %p208 = scmp.ne.s32.totalorder %s196, %s197
      %p209 = scmp.eq.s32.totalorder %s30, 1
      %p210 = por %p208, %p209
      %p212 = scmp.ne.s32.totalorder %s197, %s211
      %p213 = scmp.eq.s32.totalorder %s30, 0
      %p214 = por %p212, %p213
      %s216 = sadd.s32 %s215, 1
      %p219 = scmp.eq.s32.totalorder %s24, 1
      %p220 = scmp.ne.s32.totalorder %s215, %s217
      %p221 = scmp.eq.s32.totalorder %s24, 0
      %p222 = por %p220, %p221
      %p223 = scmp.ne.s32.totalorder %s215, %s217
      %p224 = scmp.eq.s32.totalorder %s29, 1
      %p225 = por %p223, %p224
      %p226 = scmp.ne.s32.totalorder %s217, %s218
      %p227 = scmp.eq.s32.totalorder %s29, 0
      %p228 = por %p226, %p227
      %p229 = scmp.ne.s32.totalorder %s217, %s218
      %p230 = scmp.eq.s32.totalorder %s30, 1
      %p231 = por %p229, %p230
      %p233 = scmp.ne.s32.totalorder %s218, %s232
      %p234 = scmp.eq.s32.totalorder %s30, 0
      %p235 = por %p233, %p234
      %s237 = sadd.s32 %s236, 1
      %p240 = scmp.eq.s32.totalorder %s24, 1
      %p241 = scmp.ne.s32.totalorder %s236, %s238
      %p242 = scmp.eq.s32.totalorder %s24, 0
      %p243 = por %p241, %p242
      %p244 = scmp.ne.s32.totalorder %s236, %s238
      %p245 = scmp.eq.s32.totalorder %s29, 1
      %p246 = por %p244, %p245
      %p247 = scmp.ne.s32.totalorder %s238, %s239
      %p248 = scmp.eq.s32.totalorder %s29, 0
      %p249 = por %p247, %p248
      %p250 = scmp.ne.s32.totalorder %s238, %s239
      %p251 = scmp.eq.s32.totalorder %s30, 1
      %p252 = por %p250, %p251
      %p254 = scmp.ne.s32.totalorder %s239, %s253
      %p255 = scmp.eq.s32.totalorder %s30, 0
      %p256 = por %p254, %p255
      %s258 = sadd.s32 %s257, 1
      %p261 = scmp.eq.s32.totalorder %s24, 1
      %p262 = scmp.ne.s32.totalorder %s257, %s259
      %p263 = scmp.eq.s32.totalorder %s24, 0
      %p264 = por %p262, %p263
      %p265 = scmp.ne.s32.totalorder %s257, %s259
      %p266 = scmp.eq.s32.totalorder %s29, 1
      %p267 = por %p265, %p266
      %p268 = scmp.ne.s32.totalorder %s259, %s260
      %p269 = scmp.eq.s32.totalorder %s29, 0
      %p270 = por %p268, %p269
      %p271 = scmp.ne.s32.totalorder %s259, %s260
      %p272 = scmp.eq.s32.totalorder %s30, 1
      %p273 = por %p271, %p272
      %p275 = scmp.ne.s32.totalorder %s260, %s274
      %p276 = scmp.eq.s32.totalorder %s30, 0
      %p277 = por %p275, %p276
      %s279 = sadd.s32 %s278, 1
      %p282 = scmp.eq.s32.totalorder %s24, 1
      %p283 = scmp.ne.s32.totalorder %s278, %s280
      %p284 = scmp.eq.s32.totalorder %s24, 0
      %p285 = por %p283, %p284
      %p286 = scmp.ne.s32.totalorder %s278, %s280
      %p287 = scmp.eq.s32.totalorder %s29, 1
      %p288 = por %p286, %p287
      %p289 = scmp.ne.s32.totalorder %s280, %s281
      %p290 = scmp.eq.s32.totalorder %s29, 0
      %p291 = por %p289, %p290
      %p292 = scmp.ne.s32.totalorder %s280, %s281
      %p293 = scmp.eq.s32.totalorder %s30, 1
      %p294 = por %p292, %p293
      %p296 = scmp.ne.s32.totalorder %s281, %s295
      %p297 = scmp.eq.s32.totalorder %s30, 0
      %p298 = por %p296, %p297
      %s300 = sadd.s32 %s299, 1
      %p303 = scmp.eq.s32.totalorder %s24, 1
      %p304 = scmp.ne.s32.totalorder %s299, %s301
      %p305 = scmp.eq.s32.totalorder %s24, 0
      %p306 = por %p304, %p305
      %p307 = scmp.ne.s32.totalorder %s299, %s301
      %p308 = scmp.eq.s32.totalorder %s29, 1
      %p309 = por %p307, %p308
      %p310 = scmp.ne.s32.totalorder %s301, %s302
      %p311 = scmp.eq.s32.totalorder %s29, 0
      %p312 = por %p310, %p311
      %p313 = scmp.ne.s32.totalorder %s301, %s302
      %p314 = scmp.eq.s32.totalorder %s30, 1
      %p315 = por %p313, %p314
      %p317 = scmp.ne.s32.totalorder %s302, %s316
      %p318 = scmp.eq.s32.totalorder %s30, 0
      %p319 = por %p317, %p318
      %s321 = sadd.s32 %s320, 1
      %p324 = scmp.eq.s32.totalorder %s24, 1
      %p325 = scmp.ne.s32.totalorder %s320, %s322
      %p326 = scmp.eq.s32.totalorder %s24, 0
      %p327 = por %p325, %p326
      %p328 = scmp.ne.s32.totalorder %s320, %s322
      %p329 = scmp.eq.s32.totalorder %s29, 1
      %p330 = por %p328, %p329
      %p331 = scmp.ne.s32.totalorder %s322, %s323
      %p332 = scmp.eq.s32.totalorder %s29, 0
      %p333 = por %p331, %p332
      %p334 = scmp.ne.s32.totalorder %s322, %s323
      %p335 = scmp.eq.s32.totalorder %s30, 1
      %p336 = por %p334, %p335
      %p338 = scmp.ne.s32.totalorder %s323, %s337
      %p339 = scmp.eq.s32.totalorder %s30, 0
      %p340 = por %p338, %p339
      %s342 = sadd.s32 %s341, 1
      %p345 = scmp.eq.s32.totalorder %s24, 1
      %p346 = scmp.ne.s32.totalorder %s341, %s343
      %p347 = scmp.eq.s32.totalorder %s24, 0
      %p348 = por %p346, %p347
      %p349 = scmp.ne.s32.totalorder %s341, %s343
      %p350 = scmp.eq.s32.totalorder %s29, 1
      %p351 = por %p349, %p350
      %p352 = scmp.ne.s32.totalorder %s343, %s344
      %p353 = scmp.eq.s32.totalorder %s29, 0
      %p354 = por %p352, %p353
      %p355 = scmp.ne.s32.totalorder %s343, %s344
      %p356 = scmp.eq.s32.totalorder %s30, 1
      %p357 = por %p355, %p356
      %p359 = scmp.ne.s32.totalorder %s344, %s358
      %p360 = scmp.eq.s32.totalorder %s30, 0
      %p361 = por %p359, %p360
      %s362 = ssub.s32 %s24, %s31
      %p363 = scmp.eq.s32.totalorder %s362, 0
      %s365 = sadd.s32 %s364, 1
      %s366 = scalar_select %p363, %s364, %s365
      %p369 = pneg %p363
      %p370 = scmp.eq.s32.totalorder %s24, 1
      %p371 = por %p369, %p370
      %p372 = scmp.ne.s32.totalorder %s364, %s367
      %p373 = scmp.eq.s32.totalorder %s24, 0
      %p374 = por %p372, %p373
      %p375 = scmp.ne.s32.totalorder %s364, %s367
      %p376 = scmp.eq.s32.totalorder %s29, 1
      %p377 = por %p375, %p376
      %p378 = scmp.ne.s32.totalorder %s367, %s368
      %p379 = scmp.eq.s32.totalorder %s29, 0
      %p380 = por %p378, %p379
      %p381 = scmp.ne.s32.totalorder %s367, %s368
      %p382 = scmp.eq.s32.totalorder %s30, 1
      %p383 = por %p381, %p382
      %p385 = scmp.ne.s32.totalorder %s368, %s384
      %p386 = scmp.eq.s32.totalorder %s30, 0
      %p387 = por %p385, %p386
      %p388 = scmp.le.s32.totalorder 1, %s24
      %p389 = scmp.lt.s32.totalorder %s24, 3
      %p390 = pnand %p388, %p389
      %p391 = pneg %p390
      // Predicated region
      $region9: #{tpu_custom_call.1} parent=5 // pred_check
        _
      $region10: #{tpu_custom_call.1} parent=5 // pred_check_branch
        %393 = sbr.rel (%p390) target = $region12
      $region11: #{tpu_custom_call.1} parent=5 // pred_region
        %s394 = ssub.s32 %s24, 1
        // Predicated region
        $region13: #{tpu_custom_call.1} parent=11 // pred_check
          %p395 = pneg %p123
        $region14: #{tpu_custom_call.1} parent=11 // pred_check_branch
          %397 = sbr.rel (%p395) target = $region16
        $region15: #{tpu_custom_call.1} parent=11 // pred_region
          _
        $region16: #{tpu_custom_call.1} parent=11 // pred_fallthru
          _
        // Predicated region
        $region17: #{tpu_custom_call.1} parent=11 // pred_check
          %p398 = pneg %p144
        $region18: #{tpu_custom_call.1} parent=11 // pred_check_branch
          %400 = sbr.rel (%p398) target = $region20
        $region19: #{tpu_custom_call.1} parent=11 // pred_region
          _
        $region20: #{tpu_custom_call.1} parent=11 // pred_fallthru
          _
        // Predicated region
        $region21: #{tpu_custom_call.1} parent=11 // pred_check
          %p401 = pneg %p165
        $region22: #{tpu_custom_call.1} parent=11 // pred_check_branch
          %403 = sbr.rel (%p401) target = $region24
        $region23: #{tpu_custom_call.1} parent=11 // pred_region
          _
        $region24: #{tpu_custom_call.1} parent=11 // pred_fallthru
          _
        // Predicated region
        $region25: #{tpu_custom_call.1} parent=11 // pred_check
          %p404 = pneg %p186
        $region26: #{tpu_custom_call.1} parent=11 // pred_check_branch
          %406 = sbr.rel (%p404) target = $region28
        $region27: #{tpu_custom_call.1} parent=11 // pred_region
          _
        $region28: #{tpu_custom_call.1} parent=11 // pred_fallthru
          _
        // Predicated region
        $region29: #{tpu_custom_call.1} parent=11 // pred_check
          %p407 = pneg %p207
        $region30: #{tpu_custom_call.1} parent=11 // pred_check_branch
          %409 = sbr.rel (%p407) target = $region32
        $region31: #{tpu_custom_call.1} parent=11 // pred_region
          _
        $region32: #{tpu_custom_call.1} parent=11 // pred_fallthru
          _
        // Predicated region
        $region33: #{tpu_custom_call.1} parent=11 // pred_check
          %p410 = pneg %p228
        $region34: #{tpu_custom_call.1} parent=11 // pred_check_branch
          %412 = sbr.rel (%p410) target = $region36
        $region35: #{tpu_custom_call.1} parent=11 // pred_region
          _
        $region36: #{tpu_custom_call.1} parent=11 // pred_fallthru
          _
        // Predicated region
        $region37: #{tpu_custom_call.1} parent=11 // pred_check
          %p413 = pneg %p249
        $region38: #{tpu_custom_call.1} parent=11 // pred_check_branch
          %415 = sbr.rel (%p413) target = $region40
        $region39: #{tpu_custom_call.1} parent=11 // pred_region
          _
        $region40: #{tpu_custom_call.1} parent=11 // pred_fallthru
          _
        // Predicated region
        $region41: #{tpu_custom_call.1} parent=11 // pred_check
          %p416 = pneg %p270
        $region42: #{tpu_custom_call.1} parent=11 // pred_check_branch
          %418 = sbr.rel (%p416) target = $region44
        $region43: #{tpu_custom_call.1} parent=11 // pred_region
          _
        $region44: #{tpu_custom_call.1} parent=11 // pred_fallthru
          _
        // Predicated region
        $region45: #{tpu_custom_call.1} parent=11 // pred_check
          %p419 = pneg %p291
        $region46: #{tpu_custom_call.1} parent=11 // pred_check_branch
          %421 = sbr.rel (%p419) target = $region48
        $region47: #{tpu_custom_call.1} parent=11 // pred_region
          _
        $region48: #{tpu_custom_call.1} parent=11 // pred_fallthru
          _
        // Predicated region
        $region49: #{tpu_custom_call.1} parent=11 // pred_check
          %p422 = pneg %p312
        $region50: #{tpu_custom_call.1} parent=11 // pred_check_branch
          %424 = sbr.rel (%p422) target = $region52
        $region51: #{tpu_custom_call.1} parent=11 // pred_region
          _
        $region52: #{tpu_custom_call.1} parent=11 // pred_fallthru
          _
        // Predicated region
        $region53: #{tpu_custom_call.1} parent=11 // pred_check
          %p425 = pneg %p333
        $region54: #{tpu_custom_call.1} parent=11 // pred_check_branch
          %427 = sbr.rel (%p425) target = $region56
        $region55: #{tpu_custom_call.1} parent=11 // pred_region
          _
        $region56: #{tpu_custom_call.1} parent=11 // pred_fallthru
          _
        // Predicated region
        $region57: #{tpu_custom_call.1} parent=11 // pred_check
          %p428 = pneg %p354
        $region58: #{tpu_custom_call.1} parent=11 // pred_check_branch
          %430 = sbr.rel (%p428) target = $region60
        $region59: #{tpu_custom_call.1} parent=11 // pred_region
          _
        $region60: #{tpu_custom_call.1} parent=11 // pred_fallthru
          _
      $region12: #{tpu_custom_call.1} parent=5 // pred_fallthru
        _
      %p431 = scmp.lt.s32.totalorder %s24, 2
      // Predicated region
      $region61: #{tpu_custom_call.1} parent=5 // pred_check
        %p432 = pneg %p431
      $region62: #{tpu_custom_call.1} parent=5 // pred_check_branch
        %434 = sbr.rel (%p432) target = $region64
      $region63: #{tpu_custom_call.1} parent=5 // pred_region
        // Predicated region
        $region65: #{tpu_custom_call.1} parent=63 // pred_check
          %p435 = pneg %p44
        $region66: #{tpu_custom_call.1} parent=63 // pred_check_branch
          %437 = sbr.rel (%p435) target = $region68
        $region67: #{tpu_custom_call.1} parent=63 // pred_region
          %p438 = scmp.lt.s32.totalorder %s24, 1
          %s439 = scalar_select %p438, %s24, 1
          %s440 = smul.addr %s439, 8
          %s441 = scalar_lea.vmem %s0, %s440
        $region68: #{tpu_custom_call.1} parent=63 // pred_fallthru
          _
        // Predicated region
        $region69: #{tpu_custom_call.1} parent=63 // pred_check
          %p442 = pneg %p70
        $region70: #{tpu_custom_call.1} parent=63 // pred_check_branch
          %444 = sbr.rel (%p442) target = $region72
        $region71: #{tpu_custom_call.1} parent=63 // pred_region
          %p445 = scmp.lt.s32.totalorder %s24, 1
          %s446 = scalar_select %p445, %s24, 1
          %s447 = smul.addr %s446, 2
          %s448 = smul.addr %s447, 8
          %s449 = scalar_lea.vmem %s1, %s448
        $region72: #{tpu_custom_call.1} parent=63 // pred_fallthru
          _
        // Predicated region
        $region73: #{tpu_custom_call.1} parent=63 // pred_check
          %p450 = pneg %p96
        $region74: #{tpu_custom_call.1} parent=63 // pred_check_branch
          %452 = sbr.rel (%p450) target = $region76
        $region75: #{tpu_custom_call.1} parent=63 // pred_region
          %p453 = scmp.lt.s32.totalorder %s24, 1
          %s454 = scalar_select %p453, %s24, 1
          %s455 = smul.addr %s454, 2
          %s456 = smul.addr %s455, 8
          %s457 = scalar_lea.vmem %s2, %s456
        $region76: #{tpu_custom_call.1} parent=63 // pred_fallthru
          _
      $region64: #{tpu_custom_call.1} parent=5 // pred_fallthru
        _
      %p458 = scmp.le.s32.totalorder 1, %s24
      %p459 = scmp.lt.s32.totalorder %s24, 3
      %p460 = pnand %p458, %p459
      %p461 = pneg %p460
      // Predicated region
      $region77: #{tpu_custom_call.1} parent=5 // pred_check
        _
      $region78: #{tpu_custom_call.1} parent=5 // pred_check_branch
        %463 = sbr.rel (%p460) target = $region80
      $region79: #{tpu_custom_call.1} parent=5 // pred_region
        %s464 = ssub.s32 %s24, 1
        %p465 = scmp.lt.s32.totalorder %s29, 1
        %s466 = scalar_select %p465, %s29, 1
        %s467 = smul.addr %s466, 8
        %s468 = scalar_lea.vmem %s0, %s467
        %p469 = pneg %p50
        %p470 = pneg %p47
        %p471 = scmp.lt.s32.totalorder %s29, 1
        %s472 = scalar_select %p471, %s29, 1
        %s473 = smul.addr %s472, 2
        %s474 = smul.addr %s473, 8
        %s475 = scalar_lea.vmem %s1, %s474
        %p476 = pneg %p76
        %p477 = pneg %p73
        %p478 = scmp.lt.s32.totalorder %s29, 1
        %s479 = scalar_select %p478, %s29, 1
        %s480 = smul.addr %s479, 2
        %s481 = smul.addr %s480, 8
        %s482 = scalar_lea.vmem %s2, %s481
        %p483 = pneg %p102
        %p484 = pneg %p99
        %p485 = pneg %p123
        %p486 = pneg %p120
        %p487 = pneg %p144
        %p488 = pneg %p141
        %p489 = pneg %p165
        %p490 = pneg %p162
        %p491 = pneg %p186
        %p492 = pneg %p183
        %p493 = pneg %p207
        %p494 = pneg %p204
        %p495 = pneg %p228
        %p496 = pneg %p225
        %p497 = pneg %p249
        %p498 = pneg %p246
        %p499 = pneg %p270
        %p500 = pneg %p267
        %p501 = pneg %p291
        %p502 = pneg %p288
        %p503 = pneg %p312
        %p504 = pneg %p309
        %p505 = pneg %p333
        %p506 = pneg %p330
        %p507 = pneg %p354
        %p508 = pneg %p351
        %p509 = pneg %p380
        %p510 = pneg %p377
        %s511 = sand.u32 %s367, 1
        %s512 = scalar_lea.sflag [#allocation3], %s511
        %s513 = sand.u32 %s367, 1
        %s514 = smul.addr %s513, 16
        %s515 = scalar_lea.vmem [#allocation2], %s514
        %p516 = scmp.lt.s32.totalorder %s29, 1
        %s517 = scalar_select %p516, %s29, 1
        %s518 = smul.addr %s517, 8
        %s519 = scalar_lea.vmem %s0, %s518
        %p520 = scmp.lt.s32.totalorder %s29, 1
        %s521 = scalar_select %p520, %s29, 1
        %s522 = smul.addr %s521, 2
        %s523 = smul.addr %s522, 8
        %s524 = scalar_lea.vmem %s1, %s523
        %p525 = scmp.lt.s32.totalorder %s29, 1
        %s526 = scalar_select %p525, %s29, 1
        %s527 = smul.addr %s526, 2
        %s528 = smul.addr %s527, 8
        %s529 = scalar_lea.vmem %s2, %s528
        %v531 = vld [vmem:[%s519] sm:$0xff]
        %v532 = vpack.c.bf16 %v531, %v531
        %v533 = vld [vmem:[%s529] sm:$0xff]
        %v534 = vld [vmem:[%s529 + $0x8] sm:$0x3]
        %v535 = vpack.c.bf16 %v534, %v533
        %v536 = vld [vmem:[%s524] sm:$0xff]
        %v537 = vld [vmem:[%s524 + $0x8] sm:$0x3]
        %v538 = vadd.f32 %v536, %v533
        %v539 = vadd.f32 %v537, %v534
        %v540 = vpack.c.bf16 %v539, %v538
        %v541 = vld [vmem:[%s3] sm:$0xf]
        %v542 = vld [vmem:[%s3 + $0x4] sm:$0xf]
        %v543 = vld [vmem:[%s3 + $0x8] sm:$0xf]
        %v544 = vld [vmem:[%s3 + $0xc] sm:$0xf]
        %v545 = vld [vmem:[%s4] sm:$0x1]
        %v547 = vlaneseq
        %v548 = vshrl.u32 %v547, 7
        %v549 = vsub.s32 0, %v548
        %v550 = vrot.slane %v545, %v549
        %v556 = vunpack.c.l.b16 %v541
        %v557 = vunpack.c.l.b16 %v542
        %v558 = vunpack.c.l.b16 %v543
        %v559 = vunpack.c.l.b16 %v544
        %v560 = vpack.c.b16 %v557, %v556
        %v561 = vpack.c.b16 %v559, %v558
        %vm564 = vcmask 261120
        %v566 = vsel %vm564, %v532, 0
        %568 = vmatprep.subr.bf16.mxu0 0
        %569 = vmatpush1.bf16.msra.mxu0 %v560
        %570 = vmatprep.subr.bf16.mxu0 0
        %571 = vmatpush1.bf16.msra.mxu0 %v561
        %572 = vmatprep.subr.bf16.mxu0 0
        %573 = vmatpush1.bf16.msra.mxu0 0
        %574 = vmatprep.subr.bf16.mxu0 0
        %575 = vmatpush1.bf16.msra.mxu0 0
        %576 = vmatprep.subr.bf16.mxu0 0
        %577 = vmatpush1.bf16.msra.mxu0 0
        %578 = vmatprep.subr.bf16.mxu0 0
        %579 = vmatpush1.bf16.msra.mxu0 0
        %580 = vmatprep.subr.bf16.mxu0 0
        %581 = vmatpush1.bf16.msra.mxu0 0
        %582 = vmatprep.subr.bf16.mxu0 0
        %583 = vmatpush1.bf16.msra.mxu0 0
        %584 = vmatprep.subr.bf16.mxu0 0
        %585 = vmatpush1.bf16.msra.mxu0 0
        %586 = vmatprep.subr.bf16.mxu0 0
        %587 = vmatpush1.bf16.msra.mxu0 0
        %588 = vmatprep.subr.bf16.mxu0 0
        %589 = vmatpush1.bf16.msra.mxu0 0
        %590 = vmatprep.subr.bf16.mxu0 0
        %591 = vmatpush1.bf16.msra.mxu0 0
        %592 = vmatprep.subr.bf16.mxu0 0
        %593 = vmatpush1.bf16.msra.mxu0 0
        %594 = vmatprep.subr.bf16.mxu0 0
        %595 = vmatpush1.bf16.msra.mxu0 0
        %596 = vmatprep.subr.bf16.mxu0 0
        %597 = vmatpush1.bf16.msra.mxu0 0
        %598 = vmatprep.subr.bf16.mxu0 0
        %599 = vmatpush1.bf16.msra.mxu0 0
        %600 = vmatprep.mubr.bf16.mxu0 0
        %601 = vmatmul.mubr.bf16.gmra.mrb[0].mxu0 %v566
        %v602 = vpop.f32.mrb[0].mxu0
        %v603 = vadd.f32 %v550, %v602
        %v604 = vpop.f32.mrb[0].mxu0
        %v605 = vpop.f32.mrb[0].mxu0
        %v606 = vpop.f32.mrb[0].mxu0
        %607 = vdwg.mxu0
        %v609 = vrot.slane %v603, 6
        %vm611 = vcmask 1041408
        %v612 = vsel %vm611, 1.0, %v609
        %vm614 = vcmask 1046528
        %v615 = vrot.slane %v612, 1
        %v616 = vrot.slane %v609, 1
        %v617 = vsel %vm614, %v615, %v616
        %618 = vrot.lane.b32.xlu0 %v617, 32
        %v619 = vpop.permute.xlu0 %618
        %vm621 = vcmask 1045504
        %v622 = vrot.slane %v612, 2
        %v623 = vrot.slane %v609, 2
        %v624 = vsel %vm621, %v622, %v623
        %625 = vrot.lane.b32.xlu0 %v624, 64
        %v626 = vpop.permute.xlu0 %625
        %v628 = vsel %vm564, %v612, %v619
        %vm629 = vcmask 523264
        %v630 = vsel %vm629, %v628, %v626
        %v631 = vpack.c.bf16 %v630, %v630
        %v632 = vld [vmem:[%s5] sm:$0xf]
        %v633 = vld [vmem:[%s5 + $0x4] sm:$0xf]
        %v634 = vld [vmem:[%s5 + $0x8] sm:$0xf]
        %v635 = vld [vmem:[%s5 + $0xc] sm:$0xf]
        %v636 = vld [vmem:[%s5 + $0x10] sm:$0xf]
        %v637 = vld [vmem:[%s5 + $0x14] sm:$0xf]
        %v638 = vld [vmem:[%s5 + $0x18] sm:$0xf]
        %v639 = vld [vmem:[%s5 + $0x1c] sm:$0xf]
        %v640 = vld [vmem:[%s5 + $0x20] sm:$0xf]
        %v641 = vld [vmem:[%s5 + $0x24] sm:$0xf]
        %v642 = vld [vmem:[%s5 + $0x28] sm:$0xf]
        %v643 = vld [vmem:[%s5 + $0x2c] sm:$0xf]
        %v644 = vld [vmem:[%s6] sm:$0x1]
        %v646 = vlaneseq
        %v647 = vshrl.u32 %v646, 7
        %v648 = vsub.s32 0, %v647
        %v649 = vrot.slane %v644, %v648
        %v663 = vunpack.c.l.b16 %v632
        %v664 = vunpack.c.l.b16 %v633
        %v665 = vunpack.c.l.b16 %v634
        %v666 = vunpack.c.l.b16 %v635
        %v667 = vunpack.c.l.b16 %v636
        %v668 = vunpack.c.l.b16 %v637
        %v669 = vunpack.c.l.b16 %v638
        %v670 = vunpack.c.l.b16 %v639
        %v671 = vunpack.c.l.b16 %v640
        %v672 = vunpack.c.l.b16 %v641
        %v673 = vunpack.c.l.b16 %v642
        %v674 = vunpack.c.l.b16 %v643
        %v675 = vpack.c.b16 %v664, %v663
        %v676 = vpack.c.b16 %v666, %v665
        %v677 = vpack.c.b16 %v668, %v667
        %v678 = vpack.c.b16 %v670, %v669
        %v679 = vpack.c.b16 %v672, %v671
        %v680 = vpack.c.b16 %v674, %v673
        %vm687 = vcmask 785408
        %v689 = vsel %vm687, %v631, 0
        %691 = vmatprep.subr.bf16.mxu0 0
        %692 = vmatpush1.bf16.msra.mxu0 %v675
        %693 = vmatprep.subr.bf16.mxu0 0
        %694 = vmatpush1.bf16.msra.mxu0 %v676
        %695 = vmatprep.subr.bf16.mxu0 0
        %696 = vmatpush1.bf16.msra.mxu0 %v677
        %697 = vmatprep.subr.bf16.mxu0 0
        %698 = vmatpush1.bf16.msra.mxu0 %v678
        %699 = vmatprep.subr.bf16.mxu0 0
        %700 = vmatpush1.bf16.msra.mxu0 %v679
        %701 = vmatprep.subr.bf16.mxu0 0
        %702 = vmatpush1.bf16.msra.mxu0 %v680
        %703 = vmatprep.subr.bf16.mxu0 0
        %704 = vmatpush1.bf16.msra.mxu0 0
        %705 = vmatprep.subr.bf16.mxu0 0
        %706 = vmatpush1.bf16.msra.mxu0 0
        %707 = vmatprep.subr.bf16.mxu0 0
        %708 = vmatpush1.bf16.msra.mxu0 0
        %709 = vmatprep.subr.bf16.mxu0 0
        %710 = vmatpush1.bf16.msra.mxu0 0
        %711 = vmatprep.subr.bf16.mxu0 0
        %712 = vmatpush1.bf16.msra.mxu0 0
        %713 = vmatprep.subr.bf16.mxu0 0
        %714 = vmatpush1.bf16.msra.mxu0 0
        %715 = vmatprep.subr.bf16.mxu0 0
        %716 = vmatpush1.bf16.msra.mxu0 0
        %717 = vmatprep.subr.bf16.mxu0 0
        %718 = vmatpush1.bf16.msra.mxu0 0
        %719 = vmatprep.subr.bf16.mxu0 0
        %720 = vmatpush1.bf16.msra.mxu0 0
        %721 = vmatprep.subr.bf16.mxu0 0
        %722 = vmatpush1.bf16.msra.mxu0 0
        %723 = vmatprep.mubr.bf16.mxu0 0
        %724 = vmatmul.mubr.bf16.gmra.mrb[0].mxu0 %v689
        %v725 = vpop.f32.mrb[0].mxu0
        %v726 = vadd.f32 %v649, %v725
        %v727 = vpop.f32.mrb[0].mxu0
        %v728 = vpop.f32.mrb[0].mxu0
        %v729 = vpop.f32.mrb[0].mxu0
        %730 = vdwg.mxu0
        %v731 = vxor.u32 %v726, 2147483648
        %v732 = vmul.f32 %v731, 1.442695
        %v733 = vpow.pop %v732
        %v734 = vadd.f32 %v733, 1.0
        %v735 = vrcp.pop %v734
        %v736 = vmul.f32 1.0, %v735
        %738 = vrot.lane.b32.xlu0 %v736, 96
        %v739 = vpop.permute.xlu0 %738
        %v741 = vmul.f32 %v726, %v739
        %v742 = vpack.c.bf16 %v741, %v741
        %v743 = vld [vmem:[%s7] sm:$0xf]
        %v744 = vld [vmem:[%s7 + $0x4] sm:$0xf]
        %v745 = vld [vmem:[%s7 + $0x8] sm:$0xf]
        %v746 = vld [vmem:[%s7 + $0xc] sm:$0xf]
        %v747 = vld [vmem:[%s8] sm:$0x1]
        %v749 = vlaneseq
        %v750 = vshrl.u32 %v749, 7
        %v751 = vsub.s32 0, %v750
        %v752 = vrot.slane %v747, %v751
        %v758 = vunpack.c.l.b16 %v743
        %v759 = vunpack.c.l.b16 %v744
        %v760 = vunpack.c.l.b16 %v745
        %v761 = vunpack.c.l.b16 %v746
        %v762 = vpack.c.b16 %v759, %v758
        %v763 = vpack.c.b16 %v761, %v760
        %v767 = vsel %vm564, %v742, 0
        %769 = vmatprep.subr.bf16.mxu0 0
        %770 = vmatpush1.bf16.msra.mxu0 %v762
        %771 = vmatprep.subr.bf16.mxu0 0
        %772 = vmatpush1.bf16.msra.mxu0 %v763
        %773 = vmatprep.subr.bf16.mxu0 0
        %774 = vmatpush1.bf16.msra.mxu0 0
        %775 = vmatprep.subr.bf16.mxu0 0
        %776 = vmatpush1.bf16.msra.mxu0 0
        %777 = vmatprep.subr.bf16.mxu0 0
        %778 = vmatpush1.bf16.msra.mxu0 0
        %779 = vmatprep.subr.bf16.mxu0 0
        %780 = vmatpush1.bf16.msra.mxu0 0
        %781 = vmatprep.subr.bf16.mxu0 0
        %782 = vmatpush1.bf16.msra.mxu0 0
        %783 = vmatprep.subr.bf16.mxu0 0
        %784 = vmatpush1.bf16.msra.mxu0 0
        %785 = vmatprep.subr.bf16.mxu0 0
        %786 = vmatpush1.bf16.msra.mxu0 0
        %787 = vmatprep.subr.bf16.mxu0 0
        %788 = vmatpush1.bf16.msra.mxu0 0
        %789 = vmatprep.subr.bf16.mxu0 0
        %790 = vmatpush1.bf16.msra.mxu0 0
        %791 = vmatprep.subr.bf16.mxu0 0
        %792 = vmatpush1.bf16.msra.mxu0 0
        %793 = vmatprep.subr.bf16.mxu0 0
        %794 = vmatpush1.bf16.msra.mxu0 0
        %795 = vmatprep.subr.bf16.mxu0 0
        %796 = vmatpush1.bf16.msra.mxu0 0
        %797 = vmatprep.subr.bf16.mxu0 0
        %798 = vmatpush1.bf16.msra.mxu0 0
        %799 = vmatprep.subr.bf16.mxu0 0
        %800 = vmatpush1.bf16.msra.mxu0 0
        %801 = vmatprep.mubr.bf16.mxu0 0
        %802 = vmatmul.mubr.bf16.gmra.mrb[0].mxu0 %v767
        %v803 = vpop.f32.mrb[0].mxu0
        %v804 = vadd.f32 %v752, %v803
        %v805 = vpop.f32.mrb[0].mxu0
        %v806 = vpop.f32.mrb[0].mxu0
        %v807 = vpop.f32.mrb[0].mxu0
        %808 = vdwg.mxu0
        %v809 = vadd.f32 %v531, %v804
        %v810 = vmul.f32 %v809, 0.70710677
        %v811 = vpack.c.bf16 %v810, %v810
        %v813 = vsel %vm564, %v811, 0
        %v816 = vsel %vm564, %v535, 0
        %818 = vmatprep.subr.bf16.mxu0 0
        %819 = vmatpush1.bf16.xpose.msra.mxu0 %v816
        %820 = vmatprep.subr.bf16.mxu0 0
        %821 = vmatpush1.bf16.xpose.msra.mxu0 0
        %822 = vmatprep.subr.bf16.mxu0 0
        %823 = vmatpush1.bf16.xpose.msra.mxu0 0
        %824 = vmatprep.subr.bf16.mxu0 0
        %825 = vmatpush1.bf16.xpose.msra.mxu0 0
        %826 = vmatprep.subr.bf16.mxu0 0
        %827 = vmatpush1.bf16.xpose.msra.mxu0 0
        %828 = vmatprep.subr.bf16.mxu0 0
        %829 = vmatpush1.bf16.xpose.msra.mxu0 0
        %830 = vmatprep.subr.bf16.mxu0 0
        %831 = vmatpush1.bf16.xpose.msra.mxu0 0
        %832 = vmatprep.subr.bf16.mxu0 0
        %833 = vmatpush1.bf16.xpose.msra.mxu0 0
        %834 = vmatprep.subr.bf16.mxu0 0
        %835 = vmatpush1.bf16.xpose.msra.mxu0 0
        %836 = vmatprep.subr.bf16.mxu0 0
        %837 = vmatpush1.bf16.xpose.msra.mxu0 0
        %838 = vmatprep.subr.bf16.mxu0 0
        %839 = vmatpush1.bf16.xpose.msra.mxu0 0
        %840 = vmatprep.subr.bf16.mxu0 0
        %841 = vmatpush1.bf16.xpose.msra.mxu0 0
        %842 = vmatprep.subr.bf16.mxu0 0
        %843 = vmatpush1.bf16.xpose.msra.mxu0 0
        %844 = vmatprep.subr.bf16.mxu0 0
        %845 = vmatpush1.bf16.xpose.msra.mxu0 0
        %846 = vmatprep.subr.bf16.mxu0 0
        %847 = vmatpush1.bf16.xpose.msra.mxu0 0
        %848 = vmatprep.subr.bf16.mxu0 0
        %849 = vmatpush1.bf16.xpose.msra.mxu0 0
        %850 = vmatprep.mubr.bf16.mxu0 0
        %851 = vmatmul.mubr.bf16.gmra.mrb[0].mxu0 %v813
        %v852 = vpop.f32.mrb[0].mxu0
        %v853 = vadd.f32 0.0, %v852
        %v854 = vpop.f32.mrb[0].mxu0
        %v855 = vpop.f32.mrb[0].mxu0
        %v856 = vpop.f32.mrb[0].mxu0
        %857 = vdwg.mxu0
        %vm858 = vcmask 80896
        %v859 = vsel %vm858, %v853, -inf
        %860 = vmax.xlane.f32.xlu0 %v859
        %v861 = vpop.xlane.xlu0 %860
        %v862 = vsub.f32 %v853, %v861
        %v863 = vmul.f32 %v862, 1.442695
        %v864 = vpow.pop %v863
        %v865 = vsel %vm858, %v864, 0.0
        %866 = vadd.xlane.f32.xlu0 %v865
        %v867 = vpop.xlane.xlu0 %866
        %v868 = vrcp.pop %v867
        %v869 = vmul.f32 %v864, %v868
        %v870 = vpack.c.bf16 %v869, %v869
        %v872 = vsel %vm858, %v870, 0
        %vm874 = vcmask 1044480
        %v876 = vsel %vm874, %v540, 0
        %878 = vmatprep.subr.bf16.mxu0 0
        %879 = vmatpush1.bf16.msra.mxu0 %v876
        %880 = vmatprep.subr.bf16.mxu0 0
        %881 = vmatpush1.bf16.msra.mxu0 0
        %882 = vmatprep.subr.bf16.mxu0 0
        %883 = vmatpush1.bf16.msra.mxu0 0
        %884 = vmatprep.subr.bf16.mxu0 0
        %885 = vmatpush1.bf16.msra.mxu0 0
        %886 = vmatprep.subr.bf16.mxu0 0
        %887 = vmatpush1.bf16.msra.mxu0 0
        %888 = vmatprep.subr.bf16.mxu0 0
        %889 = vmatpush1.bf16.msra.mxu0 0
        %890 = vmatprep.subr.bf16.mxu0 0
        %891 = vmatpush1.bf16.msra.mxu0 0
        %892 = vmatprep.subr.bf16.mxu0 0
        %893 = vmatpush1.bf16.msra.mxu0 0
        %894 = vmatprep.subr.bf16.mxu0 0
        %895 = vmatpush1.bf16.msra.mxu0 0
        %896 = vmatprep.subr.bf16.mxu0 0
        %897 = vmatpush1.bf16.msra.mxu0 0
        %898 = vmatprep.subr.bf16.mxu0 0
        %899 = vmatpush1.bf16.msra.mxu0 0
        %900 = vmatprep.subr.bf16.mxu0 0
        %901 = vmatpush1.bf16.msra.mxu0 0
        %902 = vmatprep.subr.bf16.mxu0 0
        %903 = vmatpush1.bf16.msra.mxu0 0
        %904 = vmatprep.subr.bf16.mxu0 0
        %905 = vmatpush1.bf16.msra.mxu0 0
        %906 = vmatprep.subr.bf16.mxu0 0
        %907 = vmatpush1.bf16.msra.mxu0 0
        %908 = vmatprep.subr.bf16.mxu0 0
        %909 = vmatpush1.bf16.msra.mxu0 0
        %910 = vmatprep.mubr.bf16.mxu0 0
        %911 = vmatmul.mubr.bf16.gmra.mrb[0].mxu0 %v872
        %v912 = vpop.f32.mrb[0].mxu0
        %v913 = vadd.f32 0.0, %v912
        %v914 = vpop.f32.mrb[0].mxu0
        %v915 = vpop.f32.mrb[0].mxu0
        %v916 = vpop.f32.mrb[0].mxu0
        %917 = vdwg.mxu0
        %v918 = vpack.c.bf16 %v913, %v913
        %v919 = vld [vmem:[%s9] sm:$0xf]
        %v920 = vld [vmem:[%s9 + $0x4] sm:$0xf]
        %v921 = vld [vmem:[%s9 + $0x8] sm:$0xf]
        %v922 = vld [vmem:[%s9 + $0xc] sm:$0xf]
        %v923 = vld [vmem:[%s10] sm:$0x1]
        %v925 = vlaneseq
        %v926 = vshrl.u32 %v925, 7
        %v927 = vsub.s32 0, %v926
        %v928 = vrot.slane %v923, %v927
        %v934 = vunpack.c.l.b16 %v919
        %v935 = vunpack.c.l.b16 %v920
        %v936 = vunpack.c.l.b16 %v921
        %v937 = vunpack.c.l.b16 %v922
        %v938 = vpack.c.b16 %v935, %v934
        %v939 = vpack.c.b16 %v937, %v936
        %v943 = vsel %vm564, %v918, 0
        %945 = vmatprep.subr.bf16.mxu0 0
        %946 = vmatpush1.bf16.msra.mxu0 %v938
        %947 = vmatprep.subr.bf16.mxu0 0
        %948 = vmatpush1.bf16.msra.mxu0 %v939
        %949 = vmatprep.subr.bf16.mxu0 0
        %950 = vmatpush1.bf16.msra.mxu0 0
        %951 = vmatprep.subr.bf16.mxu0 0
        %952 = vmatpush1.bf16.msra.mxu0 0
        %953 = vmatprep.subr.bf16.mxu0 0
        %954 = vmatpush1.bf16.msra.mxu0 0
        %955 = vmatprep.subr.bf16.mxu0 0
        %956 = vmatpush1.bf16.msra.mxu0 0
        %957 = vmatprep.subr.bf16.mxu0 0
        %958 = vmatpush1.bf16.msra.mxu0 0
        %959 = vmatprep.subr.bf16.mxu0 0
        %960 = vmatpush1.bf16.msra.mxu0 0
        %961 = vmatprep.subr.bf16.mxu0 0
        %962 = vmatpush1.bf16.msra.mxu0 0
        %963 = vmatprep.subr.bf16.mxu0 0
        %964 = vmatpush1.bf16.msra.mxu0 0
        %965 = vmatprep.subr.bf16.mxu0 0
        %966 = vmatpush1.bf16.msra.mxu0 0
        %967 = vmatprep.subr.bf16.mxu0 0
        %968 = vmatpush1.bf16.msra.mxu0 0
        %969 = vmatprep.subr.bf16.mxu0 0
        %970 = vmatpush1.bf16.msra.mxu0 0
        %971 = vmatprep.subr.bf16.mxu0 0
        %972 = vmatpush1.bf16.msra.mxu0 0
        %973 = vmatprep.subr.bf16.mxu0 0
        %974 = vmatpush1.bf16.msra.mxu0 0
        %975 = vmatprep.subr.bf16.mxu0 0
        %976 = vmatpush1.bf16.msra.mxu0 0
        %977 = vmatprep.mubr.bf16.mxu0 0
        %978 = vmatmul.mubr.bf16.gmra.mrb[0].mxu0 %v943
        %v979 = vpop.f32.mrb[0].mxu0
        %v980 = vadd.f32 %v928, %v979
        %v981 = vpop.f32.mrb[0].mxu0
        %v982 = vpop.f32.mrb[0].mxu0
        %v983 = vpop.f32.mrb[0].mxu0
        %984 = vdwg.mxu0
        %v985 = vadd.f32 %v741, %v980
        %v986 = vmul.f32 %v985, 0.70710677
        %v987 = vadd.f32 %v986, %v603
        %v988 = vmul.f32 %v987, 0.70710677
        %v990 = vrot.slane %v988, 6
        %v992 = vsel %vm611, 1.0, %v990
        %v994 = vrot.slane %v992, 1
        %v995 = vrot.slane %v990, 1
        %v996 = vsel %vm614, %v994, %v995
        %997 = vrot.lane.b32.xlu0 %v996, 32
        %v998 = vpop.permute.xlu0 %997
        %v1000 = vrot.slane %v992, 2
        %v1001 = vrot.slane %v990, 2
        %v1002 = vsel %vm621, %v1000, %v1001
        %1003 = vrot.lane.b32.xlu0 %v1002, 64
        %v1004 = vpop.permute.xlu0 %1003
        %v1006 = vsel %vm564, %v992, %v998
        %v1007 = vsel %vm629, %v1006, %v1004
        %v1008 = vpack.c.bf16 %v1007, %v1007
        %s1009 = scalar_lea.vmem %s5, 48
        %v1010 = vld [vmem:[%s1009] sm:$0xf]
        %v1011 = vld [vmem:[%s1009 + $0x4] sm:$0xf]
        %v1012 = vld [vmem:[%s1009 + $0x8] sm:$0xf]
        %v1013 = vld [vmem:[%s1009 + $0xc] sm:$0xf]
        %v1014 = vld [vmem:[%s1009 + $0x10] sm:$0xf]
        %v1015 = vld [vmem:[%s1009 + $0x14] sm:$0xf]
        %v1016 = vld [vmem:[%s1009 + $0x18] sm:$0xf]
        %v1017 = vld [vmem:[%s1009 + $0x1c] sm:$0xf]
        %v1018 = vld [vmem:[%s1009 + $0x20] sm:$0xf]
        %v1019 = vld [vmem:[%s1009 + $0x24] sm:$0xf]
        %v1020 = vld [vmem:[%s1009 + $0x28] sm:$0xf]
        %v1021 = vld [vmem:[%s1009 + $0x2c] sm:$0xf]
        %s1022 = scalar_lea.vmem %s6, 1
        %v1023 = vld [vmem:[%s1022] sm:$0x1]
        %v1025 = vlaneseq
        %v1026 = vshrl.u32 %v1025, 7
        %v1027 = vsub.s32 0, %v1026
        %v1028 = vrot.slane %v1023, %v1027
        %v1042 = vunpack.c.l.b16 %v1010
        %v1043 = vunpack.c.l.b16 %v1011
        %v1044 = vunpack.c.l.b16 %v1012
        %v1045 = vunpack.c.l.b16 %v1013
        %v1046 = vunpack.c.l.b16 %v1014
        %v1047 = vunpack.c.l.b16 %v1015
        %v1048 = vunpack.c.l.b16 %v1016
        %v1049 = vunpack.c.l.b16 %v1017
        %v1050 = vunpack.c.l.b16 %v1018
        %v1051 = vunpack.c.l.b16 %v1019
        %v1052 = vunpack.c.l.b16 %v1020
        %v1053 = vunpack.c.l.b16 %v1021
        %v1054 = vpack.c.b16 %v1043, %v1042
        %v1055 = vpack.c.b16 %v1045, %v1044
        %v1056 = vpack.c.b16 %v1047, %v1046
        %v1057 = vpack.c.b16 %v1049, %v1048
        %v1058 = vpack.c.b16 %v1051, %v1050
        %v1059 = vpack.c.b16 %v1053, %v1052
        %v1067 = vsel %vm687, %v1008, 0
        %1069 = vmatprep.subr.bf16.mxu0 0
        %1070 = vmatpush1.bf16.msra.mxu0 %v1054
        %1071 = vmatprep.subr.bf16.mxu0 0
        %1072 = vmatpush1.bf16.msra.mxu0 %v1055
        %1073 = vmatprep.subr.bf16.mxu0 0
        %1074 = vmatpush1.bf16.msra.mxu0 %v1056
        %1075 = vmatprep.subr.bf16.mxu0 0
        %1076 = vmatpush1.bf16.msra.mxu0 %v1057
        %1077 = vmatprep.subr.bf16.mxu0 0
        %1078 = vmatpush1.bf16.msra.mxu0 %v1058
        %1079 = vmatprep.subr.bf16.mxu0 0
        %1080 = vmatpush1.bf16.msra.mxu0 %v1059
        %1081 = vmatprep.subr.bf16.mxu0 0
        %1082 = vmatpush1.bf16.msra.mxu0 0
        %1083 = vmatprep.subr.bf16.mxu0 0
        %1084 = vmatpush1.bf16.msra.mxu0 0
        %1085 = vmatprep.subr.bf16.mxu0 0
        %1086 = vmatpush1.bf16.msra.mxu0 0
        %1087 = vmatprep.subr.bf16.mxu0 0
        %1088 = vmatpush1.bf16.msra.mxu0 0
        %1089 = vmatprep.subr.bf16.mxu0 0
        %1090 = vmatpush1.bf16.msra.mxu0 0
        %1091 = vmatprep.subr.bf16.mxu0 0
        %1092 = vmatpush1.bf16.msra.mxu0 0
        %1093 = vmatprep.subr.bf16.mxu0 0
        %1094 = vmatpush1.bf16.msra.mxu0 0
        %1095 = vmatprep.subr.bf16.mxu0 0
        %1096 = vmatpush1.bf16.msra.mxu0 0
        %1097 = vmatprep.subr.bf16.mxu0 0
        %1098 = vmatpush1.bf16.msra.mxu0 0
        %1099 = vmatprep.subr.bf16.mxu0 0
        %1100 = vmatpush1.bf16.msra.mxu0 0
        %1101 = vmatprep.mubr.bf16.mxu0 0
        %1102 = vmatmul.mubr.bf16.gmra.mrb[0].mxu0 %v1067
        %v1103 = vpop.f32.mrb[0].mxu0
        %v1104 = vadd.f32 %v1028, %v1103
        %v1105 = vpop.f32.mrb[0].mxu0
        %v1106 = vpop.f32.mrb[0].mxu0
        %v1107 = vpop.f32.mrb[0].mxu0
        %1108 = vdwg.mxu0
        %v1109 = vxor.u32 %v1104, 2147483648
        %v1110 = vmul.f32 %v1109, 1.442695
        %v1111 = vpow.pop %v1110
        %v1112 = vadd.f32 %v1111, 1.0
        %v1113 = vrcp.pop %v1112
        %v1114 = vmul.f32 1.0, %v1113
        %1116 = vrot.lane.b32.xlu0 %v1114, 96
        %v1117 = vpop.permute.xlu0 %1116
        %v1119 = vmul.f32 %v1104, %v1117
        %v1120 = vpack.c.bf16 %v1119, %v1119
        %v1122 = vsel %vm564, %v1120, 0
        %1124 = vmatprep.subr.bf16.mxu0 0
        %1125 = vmatpush1.bf16.msra.mxu0 %v762
        %1126 = vmatprep.subr.bf16.mxu0 0
        %1127 = vmatpush1.bf16.msra.mxu0 %v763
        %1128 = vmatprep.subr.bf16.mxu0 0
        %1129 = vmatpush1.bf16.msra.mxu0 0
        %1130 = vmatprep.subr.bf16.mxu0 0
        %1131 = vmatpush1.bf16.msra.mxu0 0
        %1132 = vmatprep.subr.bf16.mxu0 0
        %1133 = vmatpush1.bf16.msra.mxu0 0
        %1134 = vmatprep.subr.bf16.mxu0 0
        %1135 = vmatpush1.bf16.msra.mxu0 0
        %1136 = vmatprep.subr.bf16.mxu0 0
        %1137 = vmatpush1.bf16.msra.mxu0 0
        %1138 = vmatprep.subr.bf16.mxu0 0
        %1139 = vmatpush1.bf16.msra.mxu0 0
        %1140 = vmatprep.subr.bf16.mxu0 0
        %1141 = vmatpush1.bf16.msra.mxu0 0
        %1142 = vmatprep.subr.bf16.mxu0 0
        %1143 = vmatpush1.bf16.msra.mxu0 0
        %1144 = vmatprep.subr.bf16.mxu0 0
        %1145 = vmatpush1.bf16.msra.mxu0 0
        %1146 = vmatprep.subr.bf16.mxu0 0
        %1147 = vmatpush1.bf16.msra.mxu0 0
        %1148 = vmatprep.subr.bf16.mxu0 0
        %1149 = vmatpush1.bf16.msra.mxu0 0
        %1150 = vmatprep.subr.bf16.mxu0 0
        %1151 = vmatpush1.bf16.msra.mxu0 0
        %1152 = vmatprep.subr.bf16.mxu0 0
        %1153 = vmatpush1.bf16.msra.mxu0 0
        %1154 = vmatprep.subr.bf16.mxu0 0
        %1155 = vmatpush1.bf16.msra.mxu0 0
        %1156 = vmatprep.mubr.bf16.mxu0 0
        %1157 = vmatmul.mubr.bf16.gmra.mrb[0].mxu0 %v1122
        %v1158 = vpop.f32.mrb[0].mxu0
        %v1159 = vadd.f32 %v752, %v1158
        %v1160 = vpop.f32.mrb[0].mxu0
        %v1161 = vpop.f32.mrb[0].mxu0
        %v1162 = vpop.f32.mrb[0].mxu0
        %1163 = vdwg.mxu0
        %v1164 = vadd.f32 %v531, %v1159
        %v1165 = vmul.f32 %v1164, 0.70710677
        %v1166 = vpack.c.bf16 %v1165, %v1165
        %v1168 = vsel %vm564, %v1166, 0
        %1170 = vmatprep.subr.bf16.mxu0 0
        %1171 = vmatpush1.bf16.xpose.msra.mxu0 %v816
        %1172 = vmatprep.subr.bf16.mxu0 0
        %1173 = vmatpush1.bf16.xpose.msra.mxu0 0
        %1174 = vmatprep.subr.bf16.mxu0 0
        %1175 = vmatpush1.bf16.xpose.msra.mxu0 0
        %1176 = vmatprep.subr.bf16.mxu0 0
        %1177 = vmatpush1.bf16.xpose.msra.mxu0 0
        %1178 = vmatprep.subr.bf16.mxu0 0
        %1179 = vmatpush1.bf16.xpose.msra.mxu0 0
        %1180 = vmatprep.subr.bf16.mxu0 0
        %1181 = vmatpush1.bf16.xpose.msra.mxu0 0
        %1182 = vmatprep.subr.bf16.mxu0 0
        %1183 = vmatpush1.bf16.xpose.msra.mxu0 0
        %1184 = vmatprep.subr.bf16.mxu0 0
        %1185 = vmatpush1.bf16.xpose.msra.mxu0 0
        %1186 = vmatprep.subr.bf16.mxu0 0
        %1187 = vmatpush1.bf16.xpose.msra.mxu0 0
        %1188 = vmatprep.subr.bf16.mxu0 0
        %1189 = vmatpush1.bf16.xpose.msra.mxu0 0
        %1190 = vmatprep.subr.bf16.mxu0 0
        %1191 = vmatpush1.bf16.xpose.msra.mxu0 0
        %1192 = vmatprep.subr.bf16.mxu0 0
        %1193 = vmatpush1.bf16.xpose.msra.mxu0 0
        %1194 = vmatprep.subr.bf16.mxu0 0
        %1195 = vmatpush1.bf16.xpose.msra.mxu0 0
        %1196 = vmatprep.subr.bf16.mxu0 0
        %1197 = vmatpush1.bf16.xpose.msra.mxu0 0
        %1198 = vmatprep.subr.bf16.mxu0 0
        %1199 = vmatpush1.bf16.xpose.msra.mxu0 0
        %1200 = vmatprep.subr.bf16.mxu0 0
        %1201 = vmatpush1.bf16.xpose.msra.mxu0 0
        %1202 = vmatprep.mubr.bf16.mxu0 0
        %1203 = vmatmul.mubr.bf16.gmra.mrb[0].mxu0 %v1168
        %v1204 = vpop.f32.mrb[0].mxu0
        %v1205 = vadd.f32 0.0, %v1204
        %v1206 = vpop.f32.mrb[0].mxu0
        %v1207 = vpop.f32.mrb[0].mxu0
        %v1208 = vpop.f32.mrb[0].mxu0
        %1209 = vdwg.mxu0
        %v1210 = vsel %vm858, %v1205, -inf
        %1211 = vmax.xlane.f32.xlu0 %v1210
        %v1212 = vpop.xlane.xlu0 %1211
        %v1213 = vsub.f32 %v1205, %v1212
        %v1214 = vmul.f32 %v1213, 1.442695
        %v1215 = vpow.pop %v1214
        %v1216 = vsel %vm858, %v1215, 0.0
        %1217 = vadd.xlane.f32.xlu0 %v1216
        %v1218 = vpop.xlane.xlu0 %1217
        %v1219 = vrcp.pop %v1218
        %v1220 = vmul.f32 %v1215, %v1219
        %v1221 = vpack.c.bf16 %v1220, %v1220
        %v1223 = vsel %vm858, %v1221, 0
        %1225 = vmatprep.subr.bf16.mxu0 0
        %1226 = vmatpush1.bf16.msra.mxu0 %v876
        %1227 = vmatprep.subr.bf16.mxu0 0
        %1228 = vmatpush1.bf16.msra.mxu0 0
        %1229 = vmatprep.subr.bf16.mxu0 0
        %1230 = vmatpush1.bf16.msra.mxu0 0
        %1231 = vmatprep.subr.bf16.mxu0 0
        %1232 = vmatpush1.bf16.msra.mxu0 0
        %1233 = vmatprep.subr.bf16.mxu0 0
        %1234 = vmatpush1.bf16.msra.mxu0 0
        %1235 = vmatprep.subr.bf16.mxu0 0
        %1236 = vmatpush1.bf16.msra.mxu0 0
        %1237 = vmatprep.subr.bf16.mxu0 0
        %1238 = vmatpush1.bf16.msra.mxu0 0
        %1239 = vmatprep.subr.bf16.mxu0 0
        %1240 = vmatpush1.bf16.msra.mxu0 0
        %1241 = vmatprep.subr.bf16.mxu0 0
        %1242 = vmatpush1.bf16.msra.mxu0 0
        %1243 = vmatprep.subr.bf16.mxu0 0
        %1244 = vmatpush1.bf16.msra.mxu0 0
        %1245 = vmatprep.subr.bf16.mxu0 0
        %1246 = vmatpush1.bf16.msra.mxu0 0
        %1247 = vmatprep.subr.bf16.mxu0 0
        %1248 = vmatpush1.bf16.msra.mxu0 0
        %1249 = vmatprep.subr.bf16.mxu0 0
        %1250 = vmatpush1.bf16.msra.mxu0 0
        %1251 = vmatprep.subr.bf16.mxu0 0
        %1252 = vmatpush1.bf16.msra.mxu0 0
        %1253 = vmatprep.subr.bf16.mxu0 0
        %1254 = vmatpush1.bf16.msra.mxu0 0
        %1255 = vmatprep.subr.bf16.mxu0 0
        %1256 = vmatpush1.bf16.msra.mxu0 0
        %1257 = vmatprep.mubr.bf16.mxu0 0
        %1258 = vmatmul.mubr.bf16.gmra.mrb[0].mxu0 %v1223
        %v1259 = vpop.f32.mrb[0].mxu0
        %v1260 = vadd.f32 0.0, %v1259
        %v1261 = vpop.f32.mrb[0].mxu0
        %v1262 = vpop.f32.mrb[0].mxu0
        %v1263 = vpop.f32.mrb[0].mxu0
        %1264 = vdwg.mxu0
        %v1265 = vpack.c.bf16 %v1260, %v1260
        %v1267 = vsel %vm564, %v1265, 0
        %1269 = vmatprep.subr.bf16.mxu0 0
        %1270 = vmatpush1.bf16.msra.mxu0 %v938
        %1271 = vmatprep.subr.bf16.mxu0 0
        %1272 = vmatpush1.bf16.msra.mxu0 %v939
        %1273 = vmatprep.subr.bf16.mxu0 0
        %1274 = vmatpush1.bf16.msra.mxu0 0
        %1275 = vmatprep.subr.bf16.mxu0 0
        %1276 = vmatpush1.bf16.msra.mxu0 0
        %1277 = vmatprep.subr.bf16.mxu0 0
        %1278 = vmatpush1.bf16.msra.mxu0 0
        %1279 = vmatprep.subr.bf16.mxu0 0
        %1280 = vmatpush1.bf16.msra.mxu0 0
        %1281 = vmatprep.subr.bf16.mxu0 0
        %1282 = vmatpush1.bf16.msra.mxu0 0
        %1283 = vmatprep.subr.bf16.mxu0 0
        %1284 = vmatpush1.bf16.msra.mxu0 0
        %1285 = vmatprep.subr.bf16.mxu0 0
        %1286 = vmatpush1.bf16.msra.mxu0 0
        %1287 = vmatprep.subr.bf16.mxu0 0
        %1288 = vmatpush1.bf16.msra.mxu0 0
        %1289 = vmatprep.subr.bf16.mxu0 0
        %1290 = vmatpush1.bf16.msra.mxu0 0
        %1291 = vmatprep.subr.bf16.mxu0 0
        %1292 = vmatpush1.bf16.msra.mxu0 0
        %1293 = vmatprep.subr.bf16.mxu0 0
        %1294 = vmatpush1.bf16.msra.mxu0 0
        %1295 = vmatprep.subr.bf16.mxu0 0
        %1296 = vmatpush1.bf16.msra.mxu0 0
        %1297 = vmatprep.subr.bf16.mxu0 0
        %1298 = vmatpush1.bf16.msra.mxu0 0
        %1299 = vmatprep.subr.bf16.mxu0 0
        %1300 = vmatpush1.bf16.msra.mxu0 0
        %1301 = vmatprep.mubr.bf16.mxu0 0
        %1302 = vmatmul.mubr.bf16.gmra.mrb[0].mxu0 %v1267
        %v1303 = vpop.f32.mrb[0].mxu0
        %v1304 = vadd.f32 %v928, %v1303
        %v1305 = vpop.f32.mrb[0].mxu0
        %v1306 = vpop.f32.mrb[0].mxu0
        %v1307 = vpop.f32.mrb[0].mxu0
        %1308 = vdwg.mxu0
        %v1309 = vadd.f32 %v1119, %v1304
        %v1310 = vmul.f32 %v1309, 0.70710677
        %v1311 = vadd.f32 %v1310, %v988
        %v1312 = vmul.f32 %v1311, 0.70710677
        %v1313 = vpack.c.bf16 %v1312, %v1312
        %v1314 = vld [vmem:[%s11] sm:$0xf]
        %v1315 = vld [vmem:[%s11 + $0x4] sm:$0xf]
        %v1316 = vld [vmem:[%s11 + $0x8] sm:$0xf]
        %v1317 = vld [vmem:[%s11 + $0xc] sm:$0xf]
        %v1318 = vld [vmem:[%s12] sm:$0x1]
        %v1320 = vlaneseq
        %v1321 = vshrl.u32 %v1320, 7
        %v1322 = vsub.s32 0, %v1321
        %v1323 = vrot.slane %v1318, %v1322
        %v1329 = vunpack.c.l.b16 %v1314
        %v1330 = vunpack.c.l.b16 %v1315
        %v1331 = vunpack.c.l.b16 %v1316
        %v1332 = vunpack.c.l.b16 %v1317
        %v1333 = vpack.c.b16 %v1330, %v1329
        %v1334 = vpack.c.b16 %v1332, %v1331
        %v1338 = vsel %vm564, %v1313, 0
        %1340 = vmatprep.subr.bf16.mxu0 0
        %1341 = vmatpush1.bf16.msra.mxu0 %v1333
        %1342 = vmatprep.subr.bf16.mxu0 0
        %1343 = vmatpush1.bf16.msra.mxu0 %v1334
        %1344 = vmatprep.subr.bf16.mxu0 0
        %1345 = vmatpush1.bf16.msra.mxu0 0
        %1346 = vmatprep.subr.bf16.mxu0 0
        %1347 = vmatpush1.bf16.msra.mxu0 0
        %1348 = vmatprep.subr.bf16.mxu0 0
        %1349 = vmatpush1.bf16.msra.mxu0 0
        %1350 = vmatprep.subr.bf16.mxu0 0
        %1351 = vmatpush1.bf16.msra.mxu0 0
        %1352 = vmatprep.subr.bf16.mxu0 0
        %1353 = vmatpush1.bf16.msra.mxu0 0
        %1354 = vmatprep.subr.bf16.mxu0 0
        %1355 = vmatpush1.bf16.msra.mxu0 0
        %1356 = vmatprep.subr.bf16.mxu0 0
        %1357 = vmatpush1.bf16.msra.mxu0 0
        %1358 = vmatprep.subr.bf16.mxu0 0
        %1359 = vmatpush1.bf16.msra.mxu0 0
        %1360 = vmatprep.subr.bf16.mxu0 0
        %1361 = vmatpush1.bf16.msra.mxu0 0
        %1362 = vmatprep.subr.bf16.mxu0 0
        %1363 = vmatpush1.bf16.msra.mxu0 0
        %1364 = vmatprep.subr.bf16.mxu0 0
        %1365 = vmatpush1.bf16.msra.mxu0 0
        %1366 = vmatprep.subr.bf16.mxu0 0
        %1367 = vmatpush1.bf16.msra.mxu0 0
        %1368 = vmatprep.subr.bf16.mxu0 0
        %1369 = vmatpush1.bf16.msra.mxu0 0
        %1370 = vmatprep.subr.bf16.mxu0 0
        %1371 = vmatpush1.bf16.msra.mxu0 0
        %1372 = vmatprep.mubr.bf16.mxu0 0
        %1373 = vmatmul.mubr.bf16.gmra.mrb[0].mxu0 %v1338
        %v1374 = vpop.f32.mrb[0].mxu0
        %v1375 = vadd.f32 %v1323, %v1374
        %v1376 = vpop.f32.mrb[0].mxu0
        %v1377 = vpop.f32.mrb[0].mxu0
        %v1378 = vpop.f32.mrb[0].mxu0
        %1379 = vdwg.mxu0
        %v1380 = vpack.c.bf16 %v1375, %v1375
        %v1381 = vld [vmem:[%s13] sm:$0xf]
        %v1382 = vld [vmem:[%s13 + $0x4] sm:$0xf]
        %v1383 = vld [vmem:[%s13 + $0x8] sm:$0xf]
        %v1384 = vld [vmem:[%s13 + $0xc] sm:$0xf]
        %v1385 = vld [vmem:[%s14] sm:$0x1]
        %v1387 = vlaneseq
        %v1388 = vshrl.u32 %v1387, 7
        %v1389 = vsub.s32 0, %v1388
        %v1390 = vrot.slane %v1385, %v1389
        %v1396 = vunpack.c.l.b16 %v1381
        %v1397 = vunpack.c.l.b16 %v1382
        %v1398 = vunpack.c.l.b16 %v1383
        %v1399 = vunpack.c.l.b16 %v1384
        %v1400 = vpack.c.b16 %v1397, %v1396
        %v1401 = vpack.c.b16 %v1399, %v1398
        %v1405 = vsel %vm564, %v1380, 0
        %1407 = vmatprep.subr.bf16.mxu0 0
        %1408 = vmatpush1.bf16.msra.mxu0 %v1400
        %1409 = vmatprep.subr.bf16.mxu0 0
        %1410 = vmatpush1.bf16.msra.mxu0 %v1401
        %1411 = vmatprep.subr.bf16.mxu0 0
        %1412 = vmatpush1.bf16.msra.mxu0 0
        %1413 = vmatprep.subr.bf16.mxu0 0
        %1414 = vmatpush1.bf16.msra.mxu0 0
        %1415 = vmatprep.subr.bf16.mxu0 0
        %1416 = vmatpush1.bf16.msra.mxu0 0
        %1417 = vmatprep.subr.bf16.mxu0 0
        %1418 = vmatpush1.bf16.msra.mxu0 0
        %1419 = vmatprep.subr.bf16.mxu0 0
        %1420 = vmatpush1.bf16.msra.mxu0 0
        %1421 = vmatprep.subr.bf16.mxu0 0
        %1422 = vmatpush1.bf16.msra.mxu0 0
        %1423 = vmatprep.subr.bf16.mxu0 0
        %1424 = vmatpush1.bf16.msra.mxu0 0
        %1425 = vmatprep.subr.bf16.mxu0 0
        %1426 = vmatpush1.bf16.msra.mxu0 0
        %1427 = vmatprep.subr.bf16.mxu0 0
        %1428 = vmatpush1.bf16.msra.mxu0 0
        %1429 = vmatprep.subr.bf16.mxu0 0
        %1430 = vmatpush1.bf16.msra.mxu0 0
        %1431 = vmatprep.subr.bf16.mxu0 0
        %1432 = vmatpush1.bf16.msra.mxu0 0
        %1433 = vmatprep.subr.bf16.mxu0 0
        %1434 = vmatpush1.bf16.msra.mxu0 0
        %1435 = vmatprep.subr.bf16.mxu0 0
        %1436 = vmatpush1.bf16.msra.mxu0 0
        %1437 = vmatprep.subr.bf16.mxu0 0
        %1438 = vmatpush1.bf16.msra.mxu0 0
        %1439 = vmatprep.mubr.bf16.mxu0 0
        %1440 = vmatmul.mubr.bf16.gmra.mrb[0].mxu0 %v1405
        %v1441 = vpop.f32.mrb[0].mxu0
        %v1442 = vadd.f32 %v1390, %v1441
        %v1443 = vpop.f32.mrb[0].mxu0
        %v1444 = vpop.f32.mrb[0].mxu0
        %v1445 = vpop.f32.mrb[0].mxu0
        %1446 = vdwg.mxu0
        %v1447 = vsel %vm858, %v1220, 0.0
        %1448 = vst [vmem:[%s515] sm:$0xff] %v1442
        %1449 = vst [vmem:[%s515 + $0x8] sm:$0xff] %v1447
        %s1450 = sand.u32 %s367, 1
        %s1451 = scalar_lea.sflag [#allocation3], %s1450
        %s1452 = sand.u32 %s367, 1
        %s1453 = smul.addr %s1452, 16
        %s1454 = scalar_lea.vmem [#allocation2], %s1453
        // Predicated region
        $region81: #{tpu_custom_call.1} parent=79 // pred_check
          %p1455 = pneg %p377
        $region82: #{tpu_custom_call.1} parent=79 // pred_check_branch
          %1457 = sbr.rel (%p1455) target = $region84
        $region83: #{tpu_custom_call.1} parent=79 // pred_region
          %s1459 = ssub.s32 256, 256
          %1460 = vsyncadd %s1451, %s1459
          %s1461 = smul.addr %s29, 2
          %s1462 = smul.addr %s1461, 128
          %s1463 = scalar_lea.hbm %s15, %s1462
          %s1465 = sshll.u32 %s1454, 4
          %s1466 = int_to_ptr.vmem [resolvable:$true] %s1465
          %1468 = dma.vmem_to_hbm [thread:$0]  %s1466, 256, %s1463, %s1451
        $region84: #{tpu_custom_call.1} parent=79 // pred_fallthru
          _
      $region80: #{tpu_custom_call.1} parent=5 // pred_fallthru
        _
      %p1469 = scmp.le.s32.totalorder 2, %s24
      // Predicated region
      $region85: #{tpu_custom_call.1} parent=5 // pred_check
        %p1470 = pneg %p1469
      $region86: #{tpu_custom_call.1} parent=5 // pred_check_branch
        %1472 = sbr.rel (%p1470) target = $region88
      $region87: #{tpu_custom_call.1} parent=5 // pred_region
        %s1473 = ssub.s32 %s24, 2
        // Predicated region
        $region89: #{tpu_custom_call.1} parent=87 // pred_check
          %p1474 = pneg %p383
        $region90: #{tpu_custom_call.1} parent=87 // pred_check_branch
          %1476 = sbr.rel (%p1474) target = $region92
        $region91: #{tpu_custom_call.1} parent=87 // pred_region
          %s1477 = sand.u32 %s368, 1
          %s1478 = scalar_lea.sflag [#allocation3], %s1477
          %s1479 = sand.u32 %s368, 1
          %s1480 = smul.addr %s1479, 16
          %s1481 = scalar_lea.vmem [#allocation2], %s1480
          %1482 = dma.done %s1478, 256
        $region92: #{tpu_custom_call.1} parent=87 // pred_fallthru
          _
      $region88: #{tpu_custom_call.1} parent=5 // pred_fallthru
        _
    $region6: #{tpu_custom_call.1} parent=1 // loop_footer
      %s28 = sadd.s32 1, %s24
    $region7: #{tpu_custom_call.1} parent=1 // loop_footer_branch
      %23 = sbr.rel target = $region3
    $region8: #{tpu_custom_call.1} parent=1 // loop_exit
      _
    %1483 = vsyncpa [#allocation3], 1
    %s1484 = scalar_lea.sflag [#allocation3], 1
    %1485 = vsyncpa %s1484, 1

</llo_original>
